<compile_context>
chip_gen: v7x
topology: tpu7x:2x2x1
jax: 0.10.0
libtpu: 0.0.40
codegen_flags: <defaults>
</compile_context>

<pallas_src>
import functools

import jax
import jax.numpy as jnp
from jax.experimental import pallas as pl
from jax.experimental.pallas import tpu as pltpu


_BN_EPS = 1e-5
# Above the scoped-VMEM defaults on v5e/v6e, safely below v7x's 64 MiB physical VMEM.
_VMEM_LIMIT = 48 * 1024 * 1024


# ----------------- Stage 1: attention pooling + fused (Wv @ W1) Linear + BN partials -----------------
def _attn_h1_kernel(x_ref, wq_ref, wv1_ref, bv1_ref, h1_ref, psum_ref, *, n_rows):
    tb, L, D = x_ref.shape
    xf = x_ref[...]                                                 # (tb, L, D) f32, no copy/cast

    # logits = x . (Wk @ wq) / sqrt(D); the (bk@wq + bq)/sqrt(D) bias is softmax-invariant
    # (constant over L) and was dropped at fuse time.
    logits = jnp.sum(xf * wq_ref[...].reshape(1, 1, D), axis=-1)    # (tb, L) f32

    m = jnp.max(logits, axis=-1, keepdims=True)
    e = jnp.exp(logits - m)
    denom = jnp.sum(e, axis=-1, keepdims=True)
    attn = e * (1.0 / denom)              # exact divide: keeps sum(attn)==1 so the Wv hoist is exact

    # Softmax-weighted pooling as a batched MXU contraction over L (f32 accumulation) instead of
    # a VPU broadcast-multiply + sublane reduce.
    pooled = jnp.einsum("bql,bld->bqd", attn[:, None, :], xf,
                        preferred_element_type=jnp.float32)[:, 0, :]        # (tb, D)

    # h1 = relu(pooled @ (Wv@W1) + (bv@W1 + b1))   (Wv/W1 pre-fused, bf16 weights, f32 accum)
    h1 = jnp.dot(pooled.astype(jnp.bfloat16), wv1_ref[...],
                 preferred_element_type=jnp.float32) + bv1_ref[...]
    h1 = jnp.maximum(h1, 0.0)                                       # (tb, H_pad) f32
    h1_ref[...] = h1

    # Per-tile partial BatchNorm statistics; rows past the true batch (ragged last block) are
    # masked so no wrapper-side padding of x is ever needed.
    row = pl.program_id(0) * tb + jax.lax.broadcasted_iota(jnp.int32, (tb, 1), 0)
    h1m = jnp.where(row < n_rows, h1, 0.0)
    s1 = jnp.sum(h1m, axis=0, keepdims=True)                        # (1, H_pad)
    s2 = jnp.sum(h1m * h1m, axis=0, keepdims=True)                  # (1, H_pad)
    psum_ref[0] = jnp.concatenate([s1, s2], axis=0)                 # (2, H_pad)


# ----------------- Stage 2: BatchNorm-apply (pre-folded scale/shift) + MLP head ----------------------
def _bn_mlp_kernel(h1_ref, scale_ref, shift_ref, w2_ref, b2_ref, w3_ref, b3_ref, out_ref):
    h1n = h1_ref[...] * scale_ref[...] + shift_ref[...]
    h2 = jnp.maximum(
        jnp.dot(h1n.astype(jnp.bfloat16), w2_ref[...],
                preferred_element_type=jnp.float32) + b2_ref[...], 0.0)
    out = jnp.dot(h2.astype(jnp.bfloat16), w3_ref[...],
                  preferred_element_type=jnp.float32) + b3_ref[...]
    out_ref[...] = out.astype(out_ref.dtype)


# ------------------------------------ host-side preprocessing ----------------------------------------
def _round_up(v, m):
    return ((v + m - 1) // m) * m


def fuse_params(params):
    """One-time algebraic fusion + bf16 casts + lane-dense (multiple-of-128) zero padding."""
    D = params["wk"].shape[0]
    H = params["w1"].shape[1]
    c2 = params["w3"].shape[1]
    h_pad = _round_up(max(H, 128), 128)
    c2_pad = _round_up(max(c2, 128), 128)

    # lin_q o lin_k fold; 1/sqrt(D) folded in; additive bias dropped (softmax-invariant).
    wq = (params["wk"] @ params["wq"].reshape(D, 1)).reshape(1, D) / jnp.sqrt(jnp.float32(D))

    # Wv hoisted out of the pooling (softmax weights sum to 1) and fused with Linear1 (exact).
    wv1 = params["wv"] @ params["w1"]                   # (D, H)
    bv1 = params["bv"] @ params["w1"] + params["b1"]    # (1, H)

    def pad_cols(a, cols):
        return jnp.pad(a, ((0, 0), (0, cols - a.shape[1])))

    def pad_both(a, rows, cols):
        return jnp.pad(a, ((0, rows - a.shape[0]), (0, cols - a.shape[1])))

    # Zero padding is exactly neutral: padded h1/h2 columns are exactly 0 (zero weights, zero
    # bias, zero gamma/beta) and padded rows of w2/w3 contribute nothing.
    return dict(
        wq=wq.astype(jnp.float32),                                    # (1, D)
        wv1=pad_cols(wv1, h_pad).astype(jnp.bfloat16),                # (D, Hp)
        bv1=pad_cols(bv1, h_pad).astype(jnp.float32),                 # (1, Hp)
        gamma=pad_cols(params["gamma"], h_pad).astype(jnp.float32),   # (1, Hp)
        beta=pad_cols(params["beta"], h_pad).astype(jnp.float32),     # (1, Hp)
        w2=pad_both(params["w2"], h_pad, h_pad).astype(jnp.bfloat16),
        b2=pad_cols(params["b2"], h_pad).astype(jnp.float32),
        w3=pad_both(params["w3"], h_pad, c2_pad).astype(jnp.bfloat16),
        b3=pad_cols(params["b3"], c2_pad).astype(jnp.float32),
    )


def _batch_tile(n, elems_per_row, bytes_per_elem, target_bytes, cap):
    """Pick a batch-tile size: ~target_bytes per block, multiple of 8 rows, capped."""
    tb = max(8, target_bytes // (elems_per_row * bytes_per_elem))
    tb = min(int(tb), cap)
    tb = (tb // 8) * 8
    if tb >= n:
        return n, 1
    return tb, pl.cdiv(n, tb)


def intent_classifier_forward(x, fused, n_intent_classes):
    """x: (N, L, D) float32 -> (N, n_intent_classes, 2) float32 (training-mode BatchNorm)."""
    N, L, D = x.shape
    h_pad = fused["wv1"].shape[1]
    c2 = 2 * n_intent_classes
    c2_pad = fused["w3"].shape[1]

    # ---- Stage 1: attention pooling + fused Linear1, tiled over the batch ----
    # x is consumed as f32 straight from HBM (no wrapper cast/pad pass); ~8 MiB x per block.
    # TODO(synk): very long L*d_model (>1 MiB per row) would need an L-tiled two-pass softmax.
    tb, g1 = _batch_tile(N, L * D, 4, 8 * 1024 * 1024, 1024)

    kernel1 = functools.partial(_attn_h1_kernel, n_rows=N)
    h1, psums = pl.pallas_call(
        kernel1,
        out_shape=(jax.ShapeDtypeStruct((N, h_pad), jnp.float32),
                   jax.ShapeDtypeStruct((g1, 2, h_pad), jnp.float32)),
        grid_spec=pltpu.PrefetchScalarGridSpec(
            num_scalar_prefetch=0,
            grid=(g1,),
            in_specs=[
                pl.BlockSpec((tb, L, D), lambda i: (i, 0, 0)),     # x tile (double-buffered)
                pl.BlockSpec((1, D), lambda i: (0, 0)),            # weights stay VMEM-resident
                pl.BlockSpec((D, h_pad), lambda i: (0, 0)),
                pl.BlockSpec((1, h_pad), lambda i: (0, 0)),
            ],
            out_specs=[
                pl.BlockSpec((tb, h_pad), lambda i: (i, 0)),       # lane-dense h1
                pl.BlockSpec((1, 2, h_pad), lambda i: (i, 0, 0)),  # per-tile BN partial sums
            ],
        ),
        compiler_params=pltpu.CompilerParams(
            dimension_semantics=("parallel",),     # batch tiles shard across v7x's 2 TCs
            vmem_limit_bytes=_VMEM_LIMIT),
    )(x, fused["wq"], fused["wv1"], fused["bv1"])

    # ---- BatchNorm statistics: tiny (g1, 2, Hp) reduction + affine fold into scale/shift ----
    # TODO(synk): training-mode batch statistics only; eval-mode running_mean/var not modeled.
    sums = jnp.sum(psums, axis=0)                                   # (2, Hp)
    mean = sums[0] / N
    var = jnp.maximum(sums[1] / N - mean * mean, 0.0)               # biased variance
    scale = fused["gamma"] * jax.lax.rsqrt(var + _BN_EPS)           # (1, Hp)
    shift = fused["beta"] - mean * scale                            # (1, Hp)

    # ---- Stage 2: BN-apply + Linear2/ReLU/Linear3, tiled over the batch, weights resident ----
    tn, g2 = _batch_tile(N, h_pad, 4, 2 * 1024 * 1024, 512)

    out = pl.pallas_call(
        _bn_mlp_kernel,
        out_shape=jax.ShapeDtypeStruct((N, c2_pad), jnp.float32),
        grid_spec=pltpu.PrefetchScalarGridSpec(
            num_scalar_prefetch=0,
            grid=(g2,),
            in_specs=[
                pl.BlockSpec((tn, h_pad), lambda i: (i, 0)),
                pl.BlockSpec((1, h_pad), lambda i: (0, 0)),
                pl.BlockSpec((1, h_pad), lambda i: (0, 0)),
                pl.BlockSpec((h_pad, h_pad), lambda i: (0, 0)),
                pl.BlockSpec((1, h_pad), lambda i: (0, 0)),
                pl.BlockSpec((h_pad, c2_pad), lambda i: (0, 0)),
                pl.BlockSpec((1, c2_pad), lambda i: (0, 0)),
            ],
            out_specs=pl.BlockSpec((tn, c2_pad), lambda i: (i, 0)),   # lane-dense output
        ),
        compiler_params=pltpu.CompilerParams(
            dimension_semantics=("parallel",),
            vmem_limit_bytes=_VMEM_LIMIT),
    )(h1, scale, shift, fused["w2"], fused["b2"], fused["w3"], fused["b3"])

    return out[:, :c2].reshape(N, n_intent_classes, 2)


# ------------------------------------ init + pure-JAX reference --------------------------------------
def init_params(key, d_model, hidden, n_intent_classes):
    """Deterministic init mimicking PyTorch Linear default U(-1/sqrt(fan_in), 1/sqrt(fan_in))."""
    ks = jax.random.split(key, 12)

    def lin(kw, kb, fan_in, fan_out):
        bound = 1.0 / jnp.sqrt(jnp.float32(fan_in))
        w = jax.random.uniform(kw, (fan_in, fan_out), jnp.float32, -bound, bound)
        b = jax.random.uniform(kb, (1, fan_out), jnp.float32, -bound, bound)
        return w, b

    wk, bk = lin(ks[0], ks[1], d_model, d_model)            # lin_k
    wq2, bq2 = lin(ks[2], ks[3], d_model, 1)                # lin_q (out_features = 1)
    wv, bv = lin(ks[4], ks[5], d_model, d_model)            # lin_v
    w1, b1 = lin(ks[6], ks[7], d_model, hidden)             # Linear(d_model, hidden)
    w2, b2 = lin(ks[8], ks[9], hidden, hidden)              # Linear(hidden, hidden)
    w3, b3 = lin(ks[10], ks[11], hidden, n_intent_classes * 2)

    return dict(
        wk=wk, bk=bk,
        wq=wq2.reshape(1, d_model), bq=bq2.reshape(1, 1),
        wv=wv, bv=bv,
        w1=w1, b1=b1,
        gamma=jnp.ones((1, hidden), jnp.float32),            # BatchNorm1d affine
        beta=jnp.zeros((1, hidden), jnp.float32),
        w2=w2, b2=b2,
        w3=w3, b3=b3,
    )


def reference_forward(x, params, n_intent_classes):
    """Plain-JAX f32 reference replicating the PyTorch module (training-mode BatchNorm)."""
    N, L, D = x.shape
    k = x @ params["wk"] + params["bk"]
    logits = (k @ params["wq"].reshape(D, 1) + params["bq"]) / jnp.sqrt(jnp.float32(D))
    attn = jax.nn.softmax(logits[..., 0], axis=-1)           # (N, L)
    v = x @ params["wv"] + params["bv"]
    pooled = jnp.einsum("nl,nld->nd", attn, v)                # (N, D)
    h1 = jnp.maximum(pooled @ params["w1"] + params["b1"], 0.0)
    mu = jnp.mean(h1, axis=0, keepdims=True)
    var = jnp.mean((h1 - mu) ** 2, axis=0, keepdims=True)
    h1n = (h1 - mu) * jax.lax.rsqrt(var + _BN_EPS) * params["gamma"] + params["beta"]
    h2 = jnp.maximum(h1n @ params["w2"] + params["b2"], 0.0)
    out = h2 @ params["w3"] + params["b3"]
    return out.reshape(N, n_intent_classes, 2)


if __name__ == "__main__":
    # Small shapes consistent with the module's forward: (N, L, d_model) input.
    N, L, D = 16, 8, 32
    HIDDEN = 32
    N_CLASSES = 8

    key = jax.random.PRNGKey(0)
    kx, kp = jax.random.split(key)
    x = jax.random.normal(kx, (N, L, D), jnp.float32)
    params = init_params(kp, D, HIDDEN, N_CLASSES)
    fused = fuse_params(params)                  # one-time host-side fusion / cast / pad

    fwd = jax.jit(functools.partial(intent_classifier_forward, n_intent_classes=N_CLASSES))
    out = jax.block_until_ready(fwd(x, fused))
    assert out.shape == (N, N_CLASSES, 2), out.shape
    assert out.dtype == jnp.float32

    # Loose check vs a plain-JAX f32 reference of the original module (kernel uses bf16
    # weights for the big matmuls, so agreement is ~1e-2 level).
    ref = reference_forward(x, params, N_CLASSES)
    err = float(jnp.max(jnp.abs(out - ref)))
    assert err < 0.15, f"max abs error vs reference: {err}"
    print("KERNEL_OK")
</pallas_src>

<mosaic_0001>
module attributes {stable_mosaic.version = 11 : i64} {
  func.func @_attn_h1_kernel(%arg0: i32, %arg1: memref<16x8x32xf32, #tpu.memory_space<vmem>>, %arg2: memref<1x32xf32, #tpu.memory_space<vmem>>, %arg3: memref<32x128xbf16, #tpu.memory_space<vmem>>, %arg4: memref<1x128xf32, #tpu.memory_space<vmem>>, %arg5: memref<16x128xf32, #tpu.memory_space<vmem>>, %arg6: memref<1x2x128xf32, #tpu.memory_space<vmem>>) attributes {dimension_semantics = [#tpu.dimension_semantics<parallel>], iteration_bounds = array<i64: 1>, scalar_prefetch = 0 : i64, scratch_operands = 0 : i64, tpu.core_type = #tpu.core_type<tc>, window_params = [{transform_indices = @transform_0, window_bounds = array<i64: 16, 8, 32>}, {pipeline_mode = #tpu.pipeline_mode<synchronous>, transform_indices = @transform_1, window_bounds = array<i64: 1, 32>}, {pipeline_mode = #tpu.pipeline_mode<synchronous>, transform_indices = @transform_2, window_bounds = array<i64: 32, 128>}, {pipeline_mode = #tpu.pipeline_mode<synchronous>, transform_indices = @transform_3, window_bounds = array<i64: 1, 128>}, {transform_indices = @transform_4, window_bounds = array<i64: 16, 128>}, {transform_indices = @transform_5, window_bounds = array<i64: 1, 2, 128>}]} {
    %c0 = arith.constant 0 : index
    %c0_0 = arith.constant 0 : index
    %c0_1 = arith.constant 0 : index
    %0 = vector.load %arg1[%c0, %c0_0, %c0_1] : memref<16x8x32xf32, #tpu.memory_space<vmem>>, vector<16x8x32xf32>
    %c0_2 = arith.constant 0 : index
    %c0_3 = arith.constant 0 : index
    %1 = vector.load %arg2[%c0_2, %c0_3] : memref<1x32xf32, #tpu.memory_space<vmem>>, vector<1x32xf32>
    %2 = vector.shape_cast %1 : vector<1x32xf32> to vector<1x1x32xf32>
    %3 = vector.broadcast %2 : vector<1x1x32xf32> to vector<16x8x32xf32>
    %4 = arith.mulf %0, %3 : vector<16x8x32xf32>
    %cst = arith.constant dense<0.000000e+00> : vector<16x8xf32>
    %5 = vector.multi_reduction <add>, %4, %cst [2] : vector<16x8x32xf32> to vector<16x8xf32>
    %cst_4 = arith.constant dense<0xFF800000> : vector<16xf32>
    %6 = vector.multi_reduction <maximumf>, %5, %cst_4 [1] : vector<16x8xf32> to vector<16xf32>
    %7 = vector.shape_cast %6 : vector<16xf32> to vector<16x1xf32>
    %8 = vector.broadcast %7 : vector<16x1xf32> to vector<16x8xf32>
    %9 = arith.subf %5, %8 : vector<16x8xf32>
    %10 = math.exp %9 : vector<16x8xf32>
    %cst_5 = arith.constant dense<0.000000e+00> : vector<16xf32>
    %11 = vector.multi_reduction <add>, %10, %cst_5 [1] : vector<16x8xf32> to vector<16xf32>
    %12 = vector.shape_cast %11 : vector<16xf32> to vector<16x1xf32>
    %cst_6 = arith.constant 1.000000e+00 : f32
    %13 = vector.broadcast %cst_6 : f32 to vector<16x1xf32>
    %14 = arith.divf %13, %12 : vector<16x1xf32>
    %15 = vector.broadcast %14 : vector<16x1xf32> to vector<16x8xf32>
    %16 = arith.mulf %10, %15 : vector<16x8xf32>
    %17 = vector.shape_cast %16 : vector<16x8xf32> to vector<16x1x8xf32>
    "tpu.trace_start"() <{level = 10 : i32, message = "bql,bld->bqd"}> : () -> ()
    %cst_7 = arith.constant dense<0.000000e+00> : vector<16x1x32xf32>
    %18 = tpu.matmul %17, %0, %cst_7 {dimension_numbers = #tpu.dot_dimension_numbers<[2], [1], [1], [2], [0, 0, 0, 1, 1, 2], [0], [0]>} : vector<16x1x8xf32>, vector<16x8x32xf32>, vector<16x1x32xf32> -> vector<16x1x32xf32>
    "tpu.trace_stop"() : () -> ()
    %19 = vector.shape_cast %18 : vector<16x1x32xf32> to vector<16x32xf32>
    %20 = arith.truncf %19 : vector<16x32xf32> to vector<16x32xbf16>
    %c0_8 = arith.constant 0 : index
    %c0_9 = arith.constant 0 : index
    %21 = vector.load %arg3[%c0_8, %c0_9] : memref<32x128xbf16, #tpu.memory_space<vmem>>, vector<32x128xbf16>
    %cst_10 = arith.constant dense<0.000000e+00> : vector<16x128xf32>
    %22 = tpu.matmul %20, %21, %cst_10 {dimension_numbers = #tpu.dot_dimension_numbers<[1], [0], [0], [1], [0, 0, 1, 1], [], []>} : vector<16x32xbf16>, vector<32x128xbf16>, vector<16x128xf32> -> vector<16x128xf32>
    %c0_11 = arith.constant 0 : index
    %c0_12 = arith.constant 0 : index
    %23 = vector.load %arg4[%c0_11, %c0_12] : memref<1x128xf32, #tpu.memory_space<vmem>>, vector<1x128xf32>
    %24 = vector.broadcast %23 : vector<1x128xf32> to vector<16x128xf32>
    %25 = arith.addf %22, %24 : vector<16x128xf32>
    %cst_13 = arith.constant 0.000000e+00 : f32
    %26 = vector.broadcast %cst_13 : f32 to vector<16x128xf32>
    %27 = arith.maximumf %25, %26 : vector<16x128xf32>
    %c0_14 = arith.constant 0 : index
    %c0_15 = arith.constant 0 : index
    %28 = vector.load %arg5[%c0_14, %c0_15] : memref<16x128xf32, #tpu.memory_space<vmem>>, vector<16x128xf32>
    tpu.vector_store %arg5[%c0_14, %c0_15], %27 {strides = array<i32>} : memref<16x128xf32, #tpu.memory_space<vmem>>, vector<16x128xf32>,
    %c16_i32 = arith.constant 16 : i32
    %29 = arith.muli %arg0, %c16_i32 : i32
    %30 = tpu.iota {dimensions = array<i32: 0>} : vector<16x1xi32>
    %31 = vector.broadcast %29 : i32 to vector<16x1xi32>
    %32 = arith.addi %31, %30 : vector<16x1xi32>
    %c16_i32_16 = arith.constant 16 : i32
    %33 = vector.broadcast %c16_i32_16 : i32 to vector<16x1xi32>
    %34 = arith.cmpi slt, %32, %33 : vector<16x1xi32>
    %cst_17 = arith.constant 0.000000e+00 : f32
    %35 = vector.shape_cast %34 : vector<16x1xi1> to vector<16x1xi1>
    %36 = vector.broadcast %35 : vector<16x1xi1> to vector<16x128xi1>
    %37 = vector.broadcast %cst_17 : f32 to vector<16x128xf32>
    %38 = arith.select %36, %27, %37 : vector<16x128xi1>, vector<16x128xf32>
    %cst_18 = arith.constant dense<0.000000e+00> : vector<128xf32>
    %39 = vector.multi_reduction <add>, %38, %cst_18 [0] : vector<16x128xf32> to vector<128xf32>
    %40 = vector.shape_cast %39 : vector<128xf32> to vector<1x128xf32>
    %41 = arith.mulf %38, %38 : vector<16x128xf32>
    %cst_19 = arith.constant dense<0.000000e+00> : vector<128xf32>
    %42 = vector.multi_reduction <add>, %41, %cst_19 [0] : vector<16x128xf32> to vector<128xf32>
    %43 = vector.shape_cast %42 : vector<128xf32> to vector<1x128xf32>
    %44 = tpu.concatenate %40, %43 in 0 : vector<1x128xf32>, vector<1x128xf32> -> vector<2x128xf32>
    %c0_20 = arith.constant 0 : index
    %c0_21 = arith.constant 0 : index
    %c0_22 = arith.constant 0 : index
    %45 = vector.load %arg6[%c0_20, %c0_21, %c0_22] : memref<1x2x128xf32, #tpu.memory_space<vmem>>, vector<1x2x128xf32>
    %46 = vector.shape_cast %45 : vector<1x2x128xf32> to vector<2x128xf32>
    %47 = vector.shape_cast %44 : vector<2x128xf32> to vector<1x2x128xf32>
    tpu.vector_store %arg6[%c0_20, %c0_21, %c0_22], %47 {strides = array<i32>} : memref<1x2x128xf32, #tpu.memory_space<vmem>>, vector<1x2x128xf32>,
    return
  }
  func.func @transform_0(%arg0: i32) -> (i32, i32, i32) {
    %c0_i32 = arith.constant 0 : i32
    %c0_i32_0 = arith.constant 0 : i32
    %c0_i32_1 = arith.constant 0 : i32
    return %arg0, %c0_i32, %c0_i32_0 : i32, i32, i32
  }
  func.func @transform_1(%arg0: i32) -> (i32, i32) {
    %c0_i32 = arith.constant 0 : i32
    %c0_i32_0 = arith.constant 0 : i32
    %c0_i32_1 = arith.constant 0 : i32
    return %c0_i32, %c0_i32_0 : i32, i32
  }
  func.func @transform_2(%arg0: i32) -> (i32, i32) {
    %c0_i32 = arith.constant 0 : i32
    %c0_i32_0 = arith.constant 0 : i32
    %c0_i32_1 = arith.constant 0 : i32
    return %c0_i32, %c0_i32_0 : i32, i32
  }
  func.func @transform_3(%arg0: i32) -> (i32, i32) {
    %c0_i32 = arith.constant 0 : i32
    %c0_i32_0 = arith.constant 0 : i32
    %c0_i32_1 = arith.constant 0 : i32
    return %c0_i32, %c0_i32_0 : i32, i32
  }
  func.func @transform_4(%arg0: i32) -> (i32, i32) {
    %c0_i32 = arith.constant 0 : i32
    %c0_i32_0 = arith.constant 0 : i32
    return %arg0, %c0_i32 : i32, i32
  }
  func.func @transform_5(%arg0: i32) -> (i32, i32, i32) {
    %c0_i32 = arith.constant 0 : i32
    %c0_i32_0 = arith.constant 0 : i32
    %c0_i32_1 = arith.constant 0 : i32
    return %arg0, %c0_i32, %c0_i32_0 : i32, i32, i32
  }
}

module attributes {stable_mosaic.version = 11 : i64} {
  func.func @_bn_mlp_kernel(%arg0: i32, %arg1: memref<16x128xf32, #tpu.memory_space<vmem>>, %arg2: memref<1x128xf32, #tpu.memory_space<vmem>>, %arg3: memref<1x128xf32, #tpu.memory_space<vmem>>, %arg4: memref<128x128xbf16, #tpu.memory_space<vmem>>, %arg5: memref<1x128xf32, #tpu.memory_space<vmem>>, %arg6: memref<128x128xbf16, #tpu.memory_space<vmem>>, %arg7: memref<1x128xf32, #tpu.memory_space<vmem>>, %arg8: memref<16x128xf32, #tpu.memory_space<vmem>>) attributes {dimension_semantics = [#tpu.dimension_semantics<parallel>], iteration_bounds = array<i64: 1>, scalar_prefetch = 0 : i64, scratch_operands = 0 : i64, tpu.core_type = #tpu.core_type<tc>, window_params = [{transform_indices = @transform_0, window_bounds = array<i64: 16, 128>}, {pipeline_mode = #tpu.pipeline_mode<synchronous>, transform_indices = @transform_1, window_bounds = array<i64: 1, 128>}, {pipeline_mode = #tpu.pipeline_mode<synchronous>, transform_indices = @transform_2, window_bounds = array<i64: 1, 128>}, {pipeline_mode = #tpu.pipeline_mode<synchronous>, transform_indices = @transform_3, window_bounds = array<i64: 128, 128>}, {pipeline_mode = #tpu.pipeline_mode<synchronous>, transform_indices = @transform_4, window_bounds = array<i64: 1, 128>}, {pipeline_mode = #tpu.pipeline_mode<synchronous>, transform_indices = @transform_5, window_bounds = array<i64: 128, 128>}, {pipeline_mode = #tpu.pipeline_mode<synchronous>, transform_indices = @transform_6, window_bounds = array<i64: 1, 128>}, {transform_indices = @transform_7, window_bounds = array<i64: 16, 128>}]} {
    %c0 = arith.constant 0 : index
    %c0_0 = arith.constant 0 : index
    %0 = vector.load %arg1[%c0, %c0_0] : memref<16x128xf32, #tpu.memory_space<vmem>>, vector<16x128xf32>
    %c0_1 = arith.constant 0 : index
    %c0_2 = arith.constant 0 : index
    %1 = vector.load %arg2[%c0_1, %c0_2] : memref<1x128xf32, #tpu.memory_space<vmem>>, vector<1x128xf32>
    %2 = vector.broadcast %1 : vector<1x128xf32> to vector<16x128xf32>
    %3 = arith.mulf %0, %2 : vector<16x128xf32>
    %c0_3 = arith.constant 0 : index
    %c0_4 = arith.constant 0 : index
    %4 = vector.load %arg3[%c0_3, %c0_4] : memref<1x128xf32, #tpu.memory_space<vmem>>, vector<1x128xf32>
    %5 = vector.broadcast %4 : vector<1x128xf32> to vector<16x128xf32>
    %6 = arith.addf %3, %5 : vector<16x128xf32>
    %7 = arith.truncf %6 : vector<16x128xf32> to vector<16x128xbf16>
    %c0_5 = arith.constant 0 : index
    %c0_6 = arith.constant 0 : index
    %8 = vector.load %arg4[%c0_5, %c0_6] : memref<128x128xbf16, #tpu.memory_space<vmem>>, vector<128x128xbf16>
    %cst = arith.constant dense<0.000000e+00> : vector<16x128xf32>
    %9 = tpu.matmul %7, %8, %cst {dimension_numbers = #tpu.dot_dimension_numbers<[1], [0], [0], [1], [0, 0, 1, 1], [], []>} : vector<16x128xbf16>, vector<128x128xbf16>, vector<16x128xf32> -> vector<16x128xf32>
    %c0_7 = arith.constant 0 : index
    %c0_8 = arith.constant 0 : index
    %10 = vector.load %arg5[%c0_7, %c0_8] : memref<1x128xf32, #tpu.memory_space<vmem>>, vector<1x128xf32>
    %11 = vector.broadcast %10 : vector<1x128xf32> to vector<16x128xf32>
    %12 = arith.addf %9, %11 : vector<16x128xf32>
    %cst_9 = arith.constant 0.000000e+00 : f32
    %13 = vector.broadcast %cst_9 : f32 to vector<16x128xf32>
    %14 = arith.maximumf %12, %13 : vector<16x128xf32>
    %15 = arith.truncf %14 : vector<16x128xf32> to vector<16x128xbf16>
    %c0_10 = arith.constant 0 : index
    %c0_11 = arith.constant 0 : index
    %16 = vector.load %arg6[%c0_10, %c0_11] : memref<128x128xbf16, #tpu.memory_space<vmem>>, vector<128x128xbf16>
    %cst_12 = arith.constant dense<0.000000e+00> : vector<16x128xf32>
    %17 = tpu.matmul %15, %16, %cst_12 {dimension_numbers = #tpu.dot_dimension_numbers<[1], [0], [0], [1], [0, 0, 1, 1], [], []>} : vector<16x128xbf16>, vector<128x128xbf16>, vector<16x128xf32> -> vector<16x128xf32>
    %c0_13 = arith.constant 0 : index
    %c0_14 = arith.constant 0 : index
    %18 = vector.load %arg7[%c0_13, %c0_14] : memref<1x128xf32, #tpu.memory_space<vmem>>, vector<1x128xf32>
    %19 = vector.broadcast %18 : vector<1x128xf32> to vector<16x128xf32>
    %20 = arith.addf %17, %19 : vector<16x128xf32>
    %c0_15 = arith.constant 0 : index
    %c0_16 = arith.constant 0 : index
    %21 = vector.load %arg8[%c0_15, %c0_16] : memref<16x128xf32, #tpu.memory_space<vmem>>, vector<16x128xf32>
    tpu.vector_store %arg8[%c0_15, %c0_16], %20 {strides = array<i32>} : memref<16x128xf32, #tpu.memory_space<vmem>>, vector<16x128xf32>,
    return
  }
  func.func @transform_0(%arg0: i32) -> (i32, i32) {
    %c0_i32 = arith.constant 0 : i32
    %c0_i32_0 = arith.constant 0 : i32
    return %arg0, %c0_i32 : i32, i32
  }
  func.func @transform_1(%arg0: i32) -> (i32, i32) {
    %c0_i32 = arith.constant 0 : i32
    %c0_i32_0 = arith.constant 0 : i32
    %c0_i32_1 = arith.constant 0 : i32
    return %c0_i32, %c0_i32_0 : i32, i32
  }
  func.func @transform_2(%arg0: i32) -> (i32, i32) {
    %c0_i32 = arith.constant 0 : i32
    %c0_i32_0 = arith.constant 0 : i32
    %c0_i32_1 = arith.constant 0 : i32
    return %c0_i32, %c0_i32_0 : i32, i32
  }
  func.func @transform_3(%arg0: i32) -> (i32, i32) {
    %c0_i32 = arith.constant 0 : i32
    %c0_i32_0 = arith.constant 0 : i32
    %c0_i32_1 = arith.constant 0 : i32
    return %c0_i32, %c0_i32_0 : i32, i32
  }
  func.func @transform_4(%arg0: i32) -> (i32, i32) {
    %c0_i32 = arith.constant 0 : i32
    %c0_i32_0 = arith.constant 0 : i32
    %c0_i32_1 = arith.constant 0 : i32
    return %c0_i32, %c0_i32_0 : i32, i32
  }
  func.func @transform_5(%arg0: i32) -> (i32, i32) {
    %c0_i32 = arith.constant 0 : i32
    %c0_i32_0 = arith.constant 0 : i32
    %c0_i32_1 = arith.constant 0 : i32
    return %c0_i32, %c0_i32_0 : i32, i32
  }
  func.func @transform_6(%arg0: i32) -> (i32, i32) {
    %c0_i32 = arith.constant 0 : i32
    %c0_i32_0 = arith.constant 0 : i32
    %c0_i32_1 = arith.constant 0 : i32
    return %c0_i32, %c0_i32_0 : i32, i32
  }
  func.func @transform_7(%arg0: i32) -> (i32, i32) {
    %c0_i32 = arith.constant 0 : i32
    %c0_i32_0 = arith.constant 0 : i32
    return %arg0, %c0_i32 : i32, i32
  }
}

</mosaic_0001>

<llo_original>
// kernel: intent_classifier_forward.3
$region0: #{intent_classifier_forward.3}
  #allocation0 [shape = 'u32[]', space=smem, size = 0x4, offset = 0x4, fixed_abs, tag = 'smem constant byte address 0x4 - core index']
  #allocation1 [shape = 'u32[144,128]{1,0:T(1,128)}', space=vmem, size = 0x12000, scoped, tag = 'internal scratch']
  %s0 = inlined_call_operand.vmem [shape: f32[16,128], index: 0, kind: input, shape index: {}]
  %s1 = inlined_call_operand.vmem [shape: f32[1,128], index: 1, kind: input, shape index: {}]
  %s2 = inlined_call_operand.vmem [shape: f32[1,128], index: 2, kind: input, shape index: {}]
  %s3 = inlined_call_operand.vmem [shape: bf16[128,128], index: 3, kind: input, shape index: {}]
  %s4 = inlined_call_operand.vmem [shape: f32[1,128], index: 4, kind: input, shape index: {}]
  %s5 = inlined_call_operand.vmem [shape: bf16[128,128], index: 5, kind: input, shape index: {}]
  %s6 = inlined_call_operand.vmem [shape: f32[1,128], index: 6, kind: input, shape index: {}]
  %s7 = inlined_call_operand.vmem [shape: f32[16,128], index: 7, kind: output, shape index: {}]
  %s8 = sld [smem:[#allocation0]]
  $region38: #{intent_classifier_forward.3} parent=0
    _
  %s10 = ssub.s32 1, %s8
  %s11 = scalar_select 0, %s10, %s8
  // Predicated region
  $region2: #{intent_classifier_forward.3} parent=0 // pred_check
    _
  $region3: #{intent_classifier_forward.3} parent=0 // pred_check_branch
    %13 = sbr.rel (0) target = $region5
  $region4: #{intent_classifier_forward.3} parent=0 // pred_region
    _
  $region5: #{intent_classifier_forward.3} parent=0 // pred_fallthru
    _
  // Predicated region
  $region6: #{intent_classifier_forward.3} parent=0 // pred_check
    _
  $region7: #{intent_classifier_forward.3} parent=0 // pred_check_branch
    %15 = sbr.rel (0) target = $region9
  $region8: #{intent_classifier_forward.3} parent=0 // pred_region
    _
  $region9: #{intent_classifier_forward.3} parent=0 // pred_fallthru
    _
  // Predicated region
  $region10: #{intent_classifier_forward.3} parent=0 // pred_check
    _
  $region11: #{intent_classifier_forward.3} parent=0 // pred_check_branch
    %17 = sbr.rel (0) target = $region13
  $region12: #{intent_classifier_forward.3} parent=0 // pred_region
    _
  $region13: #{intent_classifier_forward.3} parent=0 // pred_fallthru
    _
  // Predicated region
  $region14: #{intent_classifier_forward.3} parent=0 // pred_check
    _
  $region15: #{intent_classifier_forward.3} parent=0 // pred_check_branch
    %19 = sbr.rel (0) target = $region17
  $region16: #{intent_classifier_forward.3} parent=0 // pred_region
    _
  $region17: #{intent_classifier_forward.3} parent=0 // pred_fallthru
    _
  // Predicated region
  $region18: #{intent_classifier_forward.3} parent=0 // pred_check
    _
  $region19: #{intent_classifier_forward.3} parent=0 // pred_check_branch
    %21 = sbr.rel (0) target = $region21
  $region20: #{intent_classifier_forward.3} parent=0 // pred_region
    _
  $region21: #{intent_classifier_forward.3} parent=0 // pred_fallthru
    _
  // Predicated region
  $region22: #{intent_classifier_forward.3} parent=0 // pred_check
    _
  $region23: #{intent_classifier_forward.3} parent=0 // pred_check_branch
    %23 = sbr.rel (0) target = $region25
  $region24: #{intent_classifier_forward.3} parent=0 // pred_region
    _
  $region25: #{intent_classifier_forward.3} parent=0 // pred_fallthru
    _
  // Predicated region
  $region26: #{intent_classifier_forward.3} parent=0 // pred_check
    _
  $region27: #{intent_classifier_forward.3} parent=0 // pred_check_branch
    %25 = sbr.rel (0) target = $region29
  $region28: #{intent_classifier_forward.3} parent=0 // pred_region
    _
  $region29: #{intent_classifier_forward.3} parent=0 // pred_fallthru
    _
  %v27 = vld [vmem:[%s0] sm:$0xff]
  %v28 = vld [vmem:[%s0 + $0x8] sm:$0xff]
  %v29 = vld [vmem:[%s1] sm:$0x1]
  %v31 = vlaneseq
  %v32 = vshrl.u32 %v31, 7
  %v33 = vsub.s32 0, %v32
  %v34 = vrot.slane %v29, %v33
  %v36 = vmul.f32 %v27, %v34
  %v37 = vmul.f32 %v28, %v34
  %v38 = vld [vmem:[%s2] sm:$0x1]
  %v40 = vlaneseq
  %v41 = vshrl.u32 %v40, 7
  %v42 = vsub.s32 0, %v41
  %v43 = vrot.slane %v38, %v42
  %v45 = vadd.f32 %v36, %v43
  %v46 = vadd.f32 %v37, %v43
  %v47 = vpack.c.bf16 %v46, %v45
  %v48 = vld [vmem:[%s3] sm:$0xf]
  %v49 = vld [vmem:[%s3 + $0x4] sm:$0xf]
  %v50 = vld [vmem:[%s3 + $0x8] sm:$0xf]
  %v51 = vld [vmem:[%s3 + $0xc] sm:$0xf]
  %v52 = vld [vmem:[%s3 + $0x10] sm:$0xf]
  %v53 = vld [vmem:[%s3 + $0x14] sm:$0xf]
  %v54 = vld [vmem:[%s3 + $0x18] sm:$0xf]
  %v55 = vld [vmem:[%s3 + $0x1c] sm:$0xf]
  %v56 = vld [vmem:[%s3 + $0x20] sm:$0xf]
  %v57 = vld [vmem:[%s3 + $0x24] sm:$0xf]
  %v58 = vld [vmem:[%s3 + $0x28] sm:$0xf]
  %v59 = vld [vmem:[%s3 + $0x2c] sm:$0xf]
  %v60 = vld [vmem:[%s3 + $0x30] sm:$0xf]
  %v61 = vld [vmem:[%s3 + $0x34] sm:$0xf]
  %v62 = vld [vmem:[%s3 + $0x38] sm:$0xf]
  %v63 = vld [vmem:[%s3 + $0x3c] sm:$0xf]
  %v64 = vld [vmem:[%s4] sm:$0x1]
  %v66 = vlaneseq
  %v67 = vshrl.u32 %v66, 7
  %v68 = vsub.s32 0, %v67
  %v69 = vrot.slane %v64, %v68
  %v87 = vunpack.c.l.b16 %v48
  %v88 = vunpack.c.l.b16 %v49
  %v89 = vunpack.c.l.b16 %v50
  %v90 = vunpack.c.l.b16 %v51
  %v91 = vunpack.c.l.b16 %v52
  %v92 = vunpack.c.l.b16 %v53
  %v93 = vunpack.c.l.b16 %v54
  %v94 = vunpack.c.l.b16 %v55
  %v95 = vunpack.c.l.b16 %v56
  %v96 = vunpack.c.l.b16 %v57
  %v97 = vunpack.c.l.b16 %v58
  %v98 = vunpack.c.l.b16 %v59
  %v99 = vunpack.c.l.b16 %v60
  %v100 = vunpack.c.l.b16 %v61
  %v101 = vunpack.c.l.b16 %v62
  %v102 = vunpack.c.l.b16 %v63
  %v103 = vpack.c.b16 %v88, %v87
  %v104 = vpack.c.b16 %v90, %v89
  %v105 = vpack.c.b16 %v92, %v91
  %v106 = vpack.c.b16 %v94, %v93
  %v107 = vpack.c.b16 %v96, %v95
  %v108 = vpack.c.b16 %v98, %v97
  %v109 = vpack.c.b16 %v100, %v99
  %v110 = vpack.c.b16 %v102, %v101
  %119 = vmatprep.subr.bf16.mxu0 0
  %120 = vmatpush1.bf16.msra.mxu0 %v103
  %121 = vmatprep.subr.bf16.mxu0 0
  %122 = vmatpush1.bf16.msra.mxu0 %v104
  %123 = vmatprep.subr.bf16.mxu0 0
  %124 = vmatpush1.bf16.msra.mxu0 %v105
  %125 = vmatprep.subr.bf16.mxu0 0
  %126 = vmatpush1.bf16.msra.mxu0 %v106
  %127 = vmatprep.subr.bf16.mxu0 0
  %128 = vmatpush1.bf16.msra.mxu0 %v107
  %129 = vmatprep.subr.bf16.mxu0 0
  %130 = vmatpush1.bf16.msra.mxu0 %v108
  %131 = vmatprep.subr.bf16.mxu0 0
  %132 = vmatpush1.bf16.msra.mxu0 %v109
  %133 = vmatprep.subr.bf16.mxu0 0
  %134 = vmatpush1.bf16.msra.mxu0 %v110
  %135 = vmatprep.subr.bf16.mxu0 0
  %136 = vmatpush1.bf16.msra.mxu0 0
  %137 = vmatprep.subr.bf16.mxu0 0
  %138 = vmatpush1.bf16.msra.mxu0 0
  %139 = vmatprep.subr.bf16.mxu0 0
  %140 = vmatpush1.bf16.msra.mxu0 0
  %141 = vmatprep.subr.bf16.mxu0 0
  %142 = vmatpush1.bf16.msra.mxu0 0
  %143 = vmatprep.subr.bf16.mxu0 0
  %144 = vmatpush1.bf16.msra.mxu0 0
  %145 = vmatprep.subr.bf16.mxu0 0
  %146 = vmatpush1.bf16.msra.mxu0 0
  %147 = vmatprep.subr.bf16.mxu0 0
  %148 = vmatpush1.bf16.msra.mxu0 0
  %149 = vmatprep.subr.bf16.mxu0 0
  %150 = vmatpush1.bf16.msra.mxu0 0
  %151 = vmatprep.mubr.bf16.mxu0 0
  %152 = vmatmul.mubr.bf16.gmra.mrb[0].mxu0 %v47
  %v153 = vpop.f32.mrb[0].mxu0
  %v154 = vadd.f32 %v69, %v153
  %v155 = vpop.f32.mrb[0].mxu0
  %v156 = vpop.f32.mrb[0].mxu0
  %v157 = vadd.f32 %v69, %v156
  %v158 = vpop.f32.mrb[0].mxu0
  %159 = vdwg.mxu0
  %v160 = vmax.f32 %v154, 0.0
  %v161 = vmax.f32 %v157, 0.0
  %v162 = vpack.c.bf16 %v161, %v160
  %v163 = vld [vmem:[%s5] sm:$0xf]
  %v164 = vld [vmem:[%s5 + $0x4] sm:$0xf]
  %v165 = vld [vmem:[%s5 + $0x8] sm:$0xf]
  %v166 = vld [vmem:[%s5 + $0xc] sm:$0xf]
  %v167 = vld [vmem:[%s5 + $0x10] sm:$0xf]
  %v168 = vld [vmem:[%s5 + $0x14] sm:$0xf]
  %v169 = vld [vmem:[%s5 + $0x18] sm:$0xf]
  %v170 = vld [vmem:[%s5 + $0x1c] sm:$0xf]
  %v171 = vld [vmem:[%s5 + $0x20] sm:$0xf]
  %v172 = vld [vmem:[%s5 + $0x24] sm:$0xf]
  %v173 = vld [vmem:[%s5 + $0x28] sm:$0xf]
  %v174 = vld [vmem:[%s5 + $0x2c] sm:$0xf]
  %v175 = vld [vmem:[%s5 + $0x30] sm:$0xf]
  %v176 = vld [vmem:[%s5 + $0x34] sm:$0xf]
  %v177 = vld [vmem:[%s5 + $0x38] sm:$0xf]
  %v178 = vld [vmem:[%s5 + $0x3c] sm:$0xf]
  %v179 = vld [vmem:[%s6] sm:$0x1]
  %v181 = vlaneseq
  %v182 = vshrl.u32 %v181, 7
  %v183 = vsub.s32 0, %v182
  %v184 = vrot.slane %v179, %v183
  %v202 = vunpack.c.l.b16 %v163
  %v203 = vunpack.c.l.b16 %v164
  %v204 = vunpack.c.l.b16 %v165
  %v205 = vunpack.c.l.b16 %v166
  %v206 = vunpack.c.l.b16 %v167
  %v207 = vunpack.c.l.b16 %v168
  %v208 = vunpack.c.l.b16 %v169
  %v209 = vunpack.c.l.b16 %v170
  %v210 = vunpack.c.l.b16 %v171
  %v211 = vunpack.c.l.b16 %v172
  %v212 = vunpack.c.l.b16 %v173
  %v213 = vunpack.c.l.b16 %v174
  %v214 = vunpack.c.l.b16 %v175
  %v215 = vunpack.c.l.b16 %v176
  %v216 = vunpack.c.l.b16 %v177
  %v217 = vunpack.c.l.b16 %v178
  %v218 = vpack.c.b16 %v203, %v202
  %v219 = vpack.c.b16 %v205, %v204
  %v220 = vpack.c.b16 %v207, %v206
  %v221 = vpack.c.b16 %v209, %v208
  %v222 = vpack.c.b16 %v211, %v210
  %v223 = vpack.c.b16 %v213, %v212
  %v224 = vpack.c.b16 %v215, %v214
  %v225 = vpack.c.b16 %v217, %v216
  %234 = vmatprep.subr.bf16.mxu0 0
  %235 = vmatpush1.bf16.msra.mxu0 %v218
  %236 = vmatprep.subr.bf16.mxu0 0
  %237 = vmatpush1.bf16.msra.mxu0 %v219
  %238 = vmatprep.subr.bf16.mxu0 0
  %239 = vmatpush1.bf16.msra.mxu0 %v220
  %240 = vmatprep.subr.bf16.mxu0 0
  %241 = vmatpush1.bf16.msra.mxu0 %v221
  %242 = vmatprep.subr.bf16.mxu0 0
  %243 = vmatpush1.bf16.msra.mxu0 %v222
  %244 = vmatprep.subr.bf16.mxu0 0
  %245 = vmatpush1.bf16.msra.mxu0 %v223
  %246 = vmatprep.subr.bf16.mxu0 0
  %247 = vmatpush1.bf16.msra.mxu0 %v224
  %248 = vmatprep.subr.bf16.mxu0 0
  %249 = vmatpush1.bf16.msra.mxu0 %v225
  %250 = vmatprep.subr.bf16.mxu0 0
  %251 = vmatpush1.bf16.msra.mxu0 0
  %252 = vmatprep.subr.bf16.mxu0 0
  %253 = vmatpush1.bf16.msra.mxu0 0
  %254 = vmatprep.subr.bf16.mxu0 0
  %255 = vmatpush1.bf16.msra.mxu0 0
  %256 = vmatprep.subr.bf16.mxu0 0
  %257 = vmatpush1.bf16.msra.mxu0 0
  %258 = vmatprep.subr.bf16.mxu0 0
  %259 = vmatpush1.bf16.msra.mxu0 0
  %260 = vmatprep.subr.bf16.mxu0 0
  %261 = vmatpush1.bf16.msra.mxu0 0
  %262 = vmatprep.subr.bf16.mxu0 0
  %263 = vmatpush1.bf16.msra.mxu0 0
  %264 = vmatprep.subr.bf16.mxu0 0
  %265 = vmatpush1.bf16.msra.mxu0 0
  %266 = vmatprep.mubr.bf16.mxu0 0
  %267 = vmatmul.mubr.bf16.gmra.mrb[0].mxu0 %v162
  %v268 = vpop.f32.mrb[0].mxu0
  %v269 = vadd.f32 %v184, %v268
  %v270 = vpop.f32.mrb[0].mxu0
  %v271 = vpop.f32.mrb[0].mxu0
  %v272 = vadd.f32 %v184, %v271
  %v273 = vpop.f32.mrb[0].mxu0
  %274 = vdwg.mxu0
  %275 = vst [vmem:[%s7] sm:$0xff] %v269
  %276 = vst [vmem:[%s7 + $0x8] sm:$0xff] %v272
  // Predicated region
  $region30: #{intent_classifier_forward.3} parent=0 // pred_check
    _
  $region31: #{intent_classifier_forward.3} parent=0 // pred_check_branch
    %278 = sbr.rel (0) target = $region33
  $region32: #{intent_classifier_forward.3} parent=0 // pred_region
    _
  $region33: #{intent_classifier_forward.3} parent=0 // pred_fallthru
    _
  // Predicated region
  $region34: #{intent_classifier_forward.3} parent=0 // pred_check
    _
  $region35: #{intent_classifier_forward.3} parent=0 // pred_check_branch
    %280 = sbr.rel (0) target = $region37
  $region36: #{intent_classifier_forward.3} parent=0 // pred_region
    _
  $region37: #{intent_classifier_forward.3} parent=0 // pred_fallthru
    _

// kernel: intent_classifier_forward.2
$region0: #{intent_classifier_forward.2}
  #allocation0 [shape = 'u32[]', space=smem, size = 0x4, offset = 0x4, fixed_abs, tag = 'smem constant byte address 0x4 - core index']
  #allocation1 [shape = 'u32[144,128]{1,0:T(1,128)}', space=vmem, size = 0x12000, scoped, tag = 'internal scratch']
  %s0 = inlined_call_operand.hbm [shape: f32[16,8,32], index: 0, kind: input, shape index: {}]
  %s1 = inlined_call_operand.vmem [shape: f32[1,32], index: 1, kind: input, shape index: {}]
  %s2 = inlined_call_operand.vmem [shape: bf16[32,128], index: 2, kind: input, shape index: {}]
  %s3 = inlined_call_operand.vmem [shape: f32[1,128], index: 3, kind: input, shape index: {}]
  %s4 = inlined_call_operand.vmem [shape: f32[16,128], index: 4, kind: output, shape index: {0}]
  %s5 = inlined_call_operand.vmem [shape: f32[1,2,128], index: 5, kind: output, shape index: {1}]
  %6 = xla_tuple %s4, %s5
  %s7 = sld [smem:[#allocation0]]
  $region38: #{intent_classifier_forward.2} parent=0
    _
  %s9 = ssub.s32 1, %s7
  %s10 = scalar_select 0, %s9, %s7
  $region1: #{intent_classifier_forward.2} parent=0
    #allocation2 [shape = 'u8[65536]{0}', space=vmem, size = 0x10000, scoped, tag = 'input window, operand 0, single buffered']
    #allocation3 [shape = 's32[1]{0}', space=sflag, size = 0x4, scoped, tag = 'scoped memory for intent_classifier_forward.2']
    %11 = vsyncpa [#allocation3], 0
    // Predicated region
    $region2: #{intent_classifier_forward.2} parent=1 // pred_check
      _
    $region3: #{intent_classifier_forward.2} parent=1 // pred_check_branch
      %13 = sbr.rel (0) target = $region5
    $region4: #{intent_classifier_forward.2} parent=1 // pred_region
      %s15 = ssub.s32 2048, 2048
      %16 = vsyncadd [#allocation3], %s15
      %s17 = sshll.u32 [#allocation2], 4
      %s18 = int_to_ptr.vmem [resolvable:$true] %s17
      %23 = dma.hbm_to_vmem [thread:$0]  %s0, 2048, %s18, [#allocation3], 128, 128, 8
    $region5: #{intent_classifier_forward.2} parent=1 // pred_fallthru
      _
    // Predicated region
    $region6: #{intent_classifier_forward.2} parent=1 // pred_check
      _
    $region7: #{intent_classifier_forward.2} parent=1 // pred_check_branch
      %25 = sbr.rel (0) target = $region9
    $region8: #{intent_classifier_forward.2} parent=1 // pred_region
      _
    $region9: #{intent_classifier_forward.2} parent=1 // pred_fallthru
      _
    // Predicated region
    $region10: #{intent_classifier_forward.2} parent=1 // pred_check
      _
    $region11: #{intent_classifier_forward.2} parent=1 // pred_check_branch
      %27 = sbr.rel (0) target = $region13
    $region12: #{intent_classifier_forward.2} parent=1 // pred_region
      _
    $region13: #{intent_classifier_forward.2} parent=1 // pred_fallthru
      _
    // Predicated region
    $region14: #{intent_classifier_forward.2} parent=1 // pred_check
      _
    $region15: #{intent_classifier_forward.2} parent=1 // pred_check_branch
      %29 = sbr.rel (0) target = $region17
    $region16: #{intent_classifier_forward.2} parent=1 // pred_region
      _
    $region17: #{intent_classifier_forward.2} parent=1 // pred_fallthru
      _
    // Predicated region
    $region18: #{intent_classifier_forward.2} parent=1 // pred_check
      _
    $region19: #{intent_classifier_forward.2} parent=1 // pred_check_branch
      %31 = sbr.rel (0) target = $region21
    $region20: #{intent_classifier_forward.2} parent=1 // pred_region
      %32 = dma.done [#allocation3], 2048
    $region21: #{intent_classifier_forward.2} parent=1 // pred_fallthru
      _
    %v34 = vld [vmem:[#allocation2] sm:$0xff]
    %v35 = vld [vmem:[#allocation2 + $0x8] sm:$0xff]
    %v36 = vld [vmem:[#allocation2 + $0x10] sm:$0xff]
    %v37 = vld [vmem:[#allocation2 + $0x18] sm:$0xff]
    %v38 = vld [vmem:[#allocation2 + $0x20] sm:$0xff]
    %v39 = vld [vmem:[#allocation2 + $0x28] sm:$0xff]
    %v40 = vld [vmem:[#allocation2 + $0x30] sm:$0xff]
    %v41 = vld [vmem:[#allocation2 + $0x38] sm:$0xff]
    %v42 = vld [vmem:[#allocation2 + $0x40] sm:$0xff]
    %v43 = vld [vmem:[#allocation2 + $0x48] sm:$0xff]
    %v44 = vld [vmem:[#allocation2 + $0x50] sm:$0xff]
    %v45 = vld [vmem:[#allocation2 + $0x58] sm:$0xff]
    %v46 = vld [vmem:[#allocation2 + $0x60] sm:$0xff]
    %v47 = vld [vmem:[#allocation2 + $0x68] sm:$0xff]
    %v48 = vld [vmem:[#allocation2 + $0x70] sm:$0xff]
    %v49 = vld [vmem:[#allocation2 + $0x78] sm:$0xff]
    %v50 = vld [vmem:[%s1] sm:$0x1]
    %v52 = vlaneseq
    %v53 = vshrl.u32 %v52, 7
    %v54 = vsub.s32 0, %v53
    %v55 = vrot.slane %v50, %v54
    %v57 = vmul.f32 %v34, %v55
    %v58 = vmul.f32 %v35, %v55
    %v59 = vmul.f32 %v36, %v55
    %v60 = vmul.f32 %v37, %v55
    %v61 = vmul.f32 %v38, %v55
    %v62 = vmul.f32 %v39, %v55
    %v63 = vmul.f32 %v40, %v55
    %v64 = vmul.f32 %v41, %v55
    %v65 = vmul.f32 %v42, %v55
    %v66 = vmul.f32 %v43, %v55
    %v67 = vmul.f32 %v44, %v55
    %v68 = vmul.f32 %v45, %v55
    %v69 = vmul.f32 %v46, %v55
    %v70 = vmul.f32 %v47, %v55
    %v71 = vmul.f32 %v48, %v55
    %v72 = vmul.f32 %v49, %v55
    %vm73 = vcmask 261120
    %v74 = vsel %vm73, %v57, 0.0
    %75 = vadd.xlane.f32.xlu0 %v74
    %v76 = vpop.xlane.xlu0 %75
    %v77 = vsel %vm73, %v58, 0.0
    %78 = vadd.xlane.f32.xlu0 %v77
    %v79 = vpop.xlane.xlu0 %78
    %v80 = vsel %vm73, %v59, 0.0
    %81 = vadd.xlane.f32.xlu0 %v80
    %v82 = vpop.xlane.xlu0 %81
    %v83 = vsel %vm73, %v60, 0.0
    %84 = vadd.xlane.f32.xlu0 %v83
    %v85 = vpop.xlane.xlu0 %84
    %v86 = vsel %vm73, %v61, 0.0
    %87 = vadd.xlane.f32.xlu0 %v86
    %v88 = vpop.xlane.xlu0 %87
    %v89 = vsel %vm73, %v62, 0.0
    %90 = vadd.xlane.f32.xlu0 %v89
    %v91 = vpop.xlane.xlu0 %90
    %v92 = vsel %vm73, %v63, 0.0
    %93 = vadd.xlane.f32.xlu0 %v92
    %v94 = vpop.xlane.xlu0 %93
    %v95 = vsel %vm73, %v64, 0.0
    %96 = vadd.xlane.f32.xlu0 %v95
    %v97 = vpop.xlane.xlu0 %96
    %v98 = vsel %vm73, %v65, 0.0
    %99 = vadd.xlane.f32.xlu0 %v98
    %v100 = vpop.xlane.xlu0 %99
    %v101 = vsel %vm73, %v66, 0.0
    %102 = vadd.xlane.f32.xlu0 %v101
    %v103 = vpop.xlane.xlu0 %102
    %v104 = vsel %vm73, %v67, 0.0
    %105 = vadd.xlane.f32.xlu0 %v104
    %v106 = vpop.xlane.xlu0 %105
    %v107 = vsel %vm73, %v68, 0.0
    %108 = vadd.xlane.f32.xlu0 %v107
    %v109 = vpop.xlane.xlu0 %108
    %v110 = vsel %vm73, %v69, 0.0
    %111 = vadd.xlane.f32.xlu0 %v110
    %v112 = vpop.xlane.xlu0 %111
    %v113 = vsel %vm73, %v70, 0.0
    %114 = vadd.xlane.f32.xlu0 %v113
    %v115 = vpop.xlane.xlu0 %114
    %v116 = vsel %vm73, %v71, 0.0
    %117 = vadd.xlane.f32.xlu0 %v116
    %v118 = vpop.xlane.xlu0 %117
    %v119 = vsel %vm73, %v72, 0.0
    %120 = vadd.xlane.f32.xlu0 %v119
    %v121 = vpop.xlane.xlu0 %120
    %v138 = vlaneseq
    %v139 = vand.u32 %v138, 127
    %v140 = vlaneseq
    %v141 = vshrl.u32 %v140, 7
    %v142 = vsub.s32 %v139, %v141
    %v143 = vrot.slane %v76, %v142
    %v144 = vlaneseq
    %v145 = vshrl.u32 %v144, 7
    %v146 = vsub.s32 %v139, %v145
    %v147 = vrot.slane %v79, %v146
    %v148 = vlaneseq
    %v149 = vshrl.u32 %v148, 7
    %v150 = vsub.s32 %v139, %v149
    %v151 = vrot.slane %v82, %v150
    %v152 = vlaneseq
    %v153 = vshrl.u32 %v152, 7
    %v154 = vsub.s32 %v139, %v153
    %v155 = vrot.slane %v85, %v154
    %v156 = vlaneseq
    %v157 = vshrl.u32 %v156, 7
    %v158 = vsub.s32 %v139, %v157
    %v159 = vrot.slane %v88, %v158
    %v160 = vlaneseq
    %v161 = vshrl.u32 %v160, 7
    %v162 = vsub.s32 %v139, %v161
    %v163 = vrot.slane %v91, %v162
    %v164 = vlaneseq
    %v165 = vshrl.u32 %v164, 7
    %v166 = vsub.s32 %v139, %v165
    %v167 = vrot.slane %v94, %v166
    %v168 = vlaneseq
    %v169 = vshrl.u32 %v168, 7
    %v170 = vsub.s32 %v139, %v169
    %v171 = vrot.slane %v97, %v170
    %v172 = vlaneseq
    %v173 = vshrl.u32 %v172, 7
    %v174 = vsub.s32 %v139, %v173
    %v175 = vrot.slane %v100, %v174
    %v176 = vlaneseq
    %v177 = vshrl.u32 %v176, 7
    %v178 = vsub.s32 %v139, %v177
    %v179 = vrot.slane %v103, %v178
    %v180 = vlaneseq
    %v181 = vshrl.u32 %v180, 7
    %v182 = vsub.s32 %v139, %v181
    %v183 = vrot.slane %v106, %v182
    %v184 = vlaneseq
    %v185 = vshrl.u32 %v184, 7
    %v186 = vsub.s32 %v139, %v185
    %v187 = vrot.slane %v109, %v186
    %v188 = vlaneseq
    %v189 = vshrl.u32 %v188, 7
    %v190 = vsub.s32 %v139, %v189
    %v191 = vrot.slane %v112, %v190
    %v192 = vlaneseq
    %v193 = vshrl.u32 %v192, 7
    %v194 = vsub.s32 %v139, %v193
    %v195 = vrot.slane %v115, %v194
    %v196 = vlaneseq
    %v197 = vshrl.u32 %v196, 7
    %v198 = vsub.s32 %v139, %v197
    %v199 = vrot.slane %v118, %v198
    %v200 = vlaneseq
    %v201 = vshrl.u32 %v200, 7
    %v202 = vsub.s32 %v139, %v201
    %v203 = vrot.slane %v121, %v202
    %vm204 = vcmask 1041409
    %v205 = vsel %vm204, %v147, %v143
    %vm206 = vcmask 1042434
    %v207 = vsel %vm206, %v151, %v205
    %vm208 = vcmask 1043459
    %v209 = vsel %vm208, %v155, %v207
    %vm210 = vcmask 1044484
    %v211 = vsel %vm210, %v159, %v209
    %vm212 = vcmask 1045509
    %v213 = vsel %vm212, %v163, %v211
    %vm214 = vcmask 1046534
    %v215 = vsel %vm214, %v167, %v213
    %vm216 = vcmask 1047559
    %v217 = vsel %vm216, %v171, %v215
    %v218 = vsel %vm204, %v179, %v175
    %v219 = vsel %vm206, %v183, %v218
    %v220 = vsel %vm208, %v187, %v219
    %v221 = vsel %vm210, %v191, %v220
    %v222 = vsel %vm212, %v195, %v221
    %v223 = vsel %vm214, %v199, %v222
    %v224 = vsel %vm216, %v203, %v223
    %vm227 = vcmask 64512
    %v228 = vsel %vm227, %v217, -inf
    %229 = vmax.xlane.f32.xlu0 %v228
    %v230 = vpop.xlane.xlu0 %229
    %v231 = vsel %vm227, %v224, -inf
    %232 = vmax.xlane.f32.xlu0 %v231
    %v233 = vpop.xlane.xlu0 %232
    %v236 = vlaneseq
    %v237 = vshrl.u32 %v236, 7
    %v238 = vsub.s32 0, %v237
    %v239 = vrot.slane %v230, %v238
    %v240 = vlaneseq
    %v241 = vshrl.u32 %v240, 7
    %v242 = vsub.s32 1, %v241
    %v243 = vrot.slane %v230, %v242
    %v244 = vlaneseq
    %v245 = vshrl.u32 %v244, 7
    %v246 = vsub.s32 2, %v245
    %v247 = vrot.slane %v230, %v246
    %v248 = vlaneseq
    %v249 = vshrl.u32 %v248, 7
    %v250 = vsub.s32 3, %v249
    %v251 = vrot.slane %v230, %v250
    %v252 = vlaneseq
    %v253 = vshrl.u32 %v252, 7
    %v254 = vsub.s32 4, %v253
    %v255 = vrot.slane %v230, %v254
    %v256 = vlaneseq
    %v257 = vshrl.u32 %v256, 7
    %v258 = vsub.s32 5, %v257
    %v259 = vrot.slane %v230, %v258
    %v260 = vlaneseq
    %v261 = vshrl.u32 %v260, 7
    %v262 = vsub.s32 6, %v261
    %v263 = vrot.slane %v230, %v262
    %v264 = vlaneseq
    %v265 = vshrl.u32 %v264, 7
    %v266 = vsub.s32 7, %v265
    %v267 = vrot.slane %v230, %v266
    %v268 = vlaneseq
    %v269 = vshrl.u32 %v268, 7
    %v270 = vsub.s32 0, %v269
    %v271 = vrot.slane %v233, %v270
    %v272 = vlaneseq
    %v273 = vshrl.u32 %v272, 7
    %v274 = vsub.s32 1, %v273
    %v275 = vrot.slane %v233, %v274
    %v276 = vlaneseq
    %v277 = vshrl.u32 %v276, 7
    %v278 = vsub.s32 2, %v277
    %v279 = vrot.slane %v233, %v278
    %v280 = vlaneseq
    %v281 = vshrl.u32 %v280, 7
    %v282 = vsub.s32 3, %v281
    %v283 = vrot.slane %v233, %v282
    %v284 = vlaneseq
    %v285 = vshrl.u32 %v284, 7
    %v286 = vsub.s32 4, %v285
    %v287 = vrot.slane %v233, %v286
    %v288 = vlaneseq
    %v289 = vshrl.u32 %v288, 7
    %v290 = vsub.s32 5, %v289
    %v291 = vrot.slane %v233, %v290
    %v292 = vlaneseq
    %v293 = vshrl.u32 %v292, 7
    %v294 = vsub.s32 6, %v293
    %v295 = vrot.slane %v233, %v294
    %v296 = vlaneseq
    %v297 = vshrl.u32 %v296, 7
    %v298 = vsub.s32 7, %v297
    %v299 = vrot.slane %v233, %v298
    %v316 = vsub.f32 %v76, %v239
    %v317 = vsub.f32 %v79, %v243
    %v318 = vsub.f32 %v82, %v247
    %v319 = vsub.f32 %v85, %v251
    %v320 = vsub.f32 %v88, %v255
    %v321 = vsub.f32 %v91, %v259
    %v322 = vsub.f32 %v94, %v263
    %v323 = vsub.f32 %v97, %v267
    %v324 = vsub.f32 %v100, %v271
    %v325 = vsub.f32 %v103, %v275
    %v326 = vsub.f32 %v106, %v279
    %v327 = vsub.f32 %v109, %v283
    %v328 = vsub.f32 %v112, %v287
    %v329 = vsub.f32 %v115, %v291
    %v330 = vsub.f32 %v118, %v295
    %v331 = vsub.f32 %v121, %v299
    %v332 = vmul.f32 %v316, 1.442695
    %v333 = vpow.pop %v332
    %v334 = vmul.f32 %v317, 1.442695
    %v335 = vpow.pop %v334
    %v336 = vmul.f32 %v318, 1.442695
    %v337 = vpow.pop %v336
    %v338 = vmul.f32 %v319, 1.442695
    %v339 = vpow.pop %v338
    %v340 = vmul.f32 %v320, 1.442695
    %v341 = vpow.pop %v340
    %v342 = vmul.f32 %v321, 1.442695
    %v343 = vpow.pop %v342
    %v344 = vmul.f32 %v322, 1.442695
    %v345 = vpow.pop %v344
    %v346 = vmul.f32 %v323, 1.442695
    %v347 = vpow.pop %v346
    %v348 = vmul.f32 %v324, 1.442695
    %v349 = vpow.pop %v348
    %v350 = vmul.f32 %v325, 1.442695
    %v351 = vpow.pop %v350
    %v352 = vmul.f32 %v326, 1.442695
    %v353 = vpow.pop %v352
    %v354 = vmul.f32 %v327, 1.442695
    %v355 = vpow.pop %v354
    %v356 = vmul.f32 %v328, 1.442695
    %v357 = vpow.pop %v356
    %v358 = vmul.f32 %v329, 1.442695
    %v359 = vpow.pop %v358
    %v360 = vmul.f32 %v330, 1.442695
    %v361 = vpow.pop %v360
    %v362 = vmul.f32 %v331, 1.442695
    %v363 = vpow.pop %v362
    %380 = vset.pattern.permute.xlu0 0
    %381 = vperm.xlu0 %380, %v333
    %v382 = vpop.permute.xlu0 %381
    %383 = vset.pattern.permute.xlu0 0
    %384 = vperm.xlu0 %383, %v335
    %v385 = vpop.permute.xlu0 %384
    %386 = vset.pattern.permute.xlu0 0
    %387 = vperm.xlu0 %386, %v337
    %v388 = vpop.permute.xlu0 %387
    %389 = vset.pattern.permute.xlu0 0
    %390 = vperm.xlu0 %389, %v339
    %v391 = vpop.permute.xlu0 %390
    %392 = vset.pattern.permute.xlu0 0
    %393 = vperm.xlu0 %392, %v341
    %v394 = vpop.permute.xlu0 %393
    %395 = vset.pattern.permute.xlu0 0
    %396 = vperm.xlu0 %395, %v343
    %v397 = vpop.permute.xlu0 %396
    %398 = vset.pattern.permute.xlu0 0
    %399 = vperm.xlu0 %398, %v345
    %v400 = vpop.permute.xlu0 %399
    %401 = vset.pattern.permute.xlu0 0
    %402 = vperm.xlu0 %401, %v347
    %v403 = vpop.permute.xlu0 %402
    %404 = vset.pattern.permute.xlu0 0
    %405 = vperm.xlu0 %404, %v349
    %v406 = vpop.permute.xlu0 %405
    %407 = vset.pattern.permute.xlu0 0
    %408 = vperm.xlu0 %407, %v351
    %v409 = vpop.permute.xlu0 %408
    %410 = vset.pattern.permute.xlu0 0
    %411 = vperm.xlu0 %410, %v353
    %v412 = vpop.permute.xlu0 %411
    %413 = vset.pattern.permute.xlu0 0
    %414 = vperm.xlu0 %413, %v355
    %v415 = vpop.permute.xlu0 %414
    %416 = vset.pattern.permute.xlu0 0
    %417 = vperm.xlu0 %416, %v357
    %v418 = vpop.permute.xlu0 %417
    %419 = vset.pattern.permute.xlu0 0
    %420 = vperm.xlu0 %419, %v359
    %v421 = vpop.permute.xlu0 %420
    %422 = vset.pattern.permute.xlu0 0
    %423 = vperm.xlu0 %422, %v361
    %v424 = vpop.permute.xlu0 %423
    %425 = vset.pattern.permute.xlu0 0
    %426 = vperm.xlu0 %425, %v363
    %v427 = vpop.permute.xlu0 %426
    %v428 = vlaneseq
    %v429 = vshrl.u32 %v428, 7
    %v430 = vsub.s32 %v139, %v429
    %v431 = vrot.slane %v382, %v430
    %v432 = vlaneseq
    %v433 = vshrl.u32 %v432, 7
    %v434 = vsub.s32 %v139, %v433
    %v435 = vrot.slane %v385, %v434
    %v436 = vlaneseq
    %v437 = vshrl.u32 %v436, 7
    %v438 = vsub.s32 %v139, %v437
    %v439 = vrot.slane %v388, %v438
    %v440 = vlaneseq
    %v441 = vshrl.u32 %v440, 7
    %v442 = vsub.s32 %v139, %v441
    %v443 = vrot.slane %v391, %v442
    %v444 = vlaneseq
    %v445 = vshrl.u32 %v444, 7
    %v446 = vsub.s32 %v139, %v445
    %v447 = vrot.slane %v394, %v446
    %v448 = vlaneseq
    %v449 = vshrl.u32 %v448, 7
    %v450 = vsub.s32 %v139, %v449
    %v451 = vrot.slane %v397, %v450
    %v452 = vlaneseq
    %v453 = vshrl.u32 %v452, 7
    %v454 = vsub.s32 %v139, %v453
    %v455 = vrot.slane %v400, %v454
    %v456 = vlaneseq
    %v457 = vshrl.u32 %v456, 7
    %v458 = vsub.s32 %v139, %v457
    %v459 = vrot.slane %v403, %v458
    %v460 = vlaneseq
    %v461 = vshrl.u32 %v460, 7
    %v462 = vsub.s32 %v139, %v461
    %v463 = vrot.slane %v406, %v462
    %v464 = vlaneseq
    %v465 = vshrl.u32 %v464, 7
    %v466 = vsub.s32 %v139, %v465
    %v467 = vrot.slane %v409, %v466
    %v468 = vlaneseq
    %v469 = vshrl.u32 %v468, 7
    %v470 = vsub.s32 %v139, %v469
    %v471 = vrot.slane %v412, %v470
    %v472 = vlaneseq
    %v473 = vshrl.u32 %v472, 7
    %v474 = vsub.s32 %v139, %v473
    %v475 = vrot.slane %v415, %v474
    %v476 = vlaneseq
    %v477 = vshrl.u32 %v476, 7
    %v478 = vsub.s32 %v139, %v477
    %v479 = vrot.slane %v418, %v478
    %v480 = vlaneseq
    %v481 = vshrl.u32 %v480, 7
    %v482 = vsub.s32 %v139, %v481
    %v483 = vrot.slane %v421, %v482
    %v484 = vlaneseq
    %v485 = vshrl.u32 %v484, 7
    %v486 = vsub.s32 %v139, %v485
    %v487 = vrot.slane %v424, %v486
    %v488 = vlaneseq
    %v489 = vshrl.u32 %v488, 7
    %v490 = vsub.s32 %v139, %v489
    %v491 = vrot.slane %v427, %v490
    %v492 = vsel %vm204, %v435, %v431
    %v493 = vsel %vm206, %v439, %v492
    %v494 = vsel %vm208, %v443, %v493
    %v495 = vsel %vm210, %v447, %v494
    %v496 = vsel %vm212, %v451, %v495
    %v497 = vsel %vm214, %v455, %v496
    %v498 = vsel %vm216, %v459, %v497
    %v499 = vsel %vm204, %v467, %v463
    %v500 = vsel %vm206, %v471, %v499
    %v501 = vsel %vm208, %v475, %v500
    %v502 = vsel %vm210, %v479, %v501
    %v503 = vsel %vm212, %v483, %v502
    %v504 = vsel %vm214, %v487, %v503
    %v505 = vsel %vm216, %v491, %v504
    %v508 = vsel %vm227, %v498, 0.0
    %509 = vadd.xlane.f32.xlu0 %v508
    %v510 = vpop.xlane.xlu0 %509
    %v511 = vsel %vm227, %v505, 0.0
    %512 = vadd.xlane.f32.xlu0 %v511
    %v513 = vpop.xlane.xlu0 %512
    %v514 = vrcp.pop %v510
    %v515 = vmul.f32 1.0, %v514
    %v516 = vrcp.pop %v513
    %v517 = vmul.f32 1.0, %v516
    %v520 = vlaneseq
    %v521 = vshrl.u32 %v520, 7
    %v522 = vsub.s32 0, %v521
    %v523 = vrot.slane %v515, %v522
    %v524 = vlaneseq
    %v525 = vshrl.u32 %v524, 7
    %v526 = vsub.s32 1, %v525
    %v527 = vrot.slane %v515, %v526
    %v528 = vlaneseq
    %v529 = vshrl.u32 %v528, 7
    %v530 = vsub.s32 2, %v529
    %v531 = vrot.slane %v515, %v530
    %v532 = vlaneseq
    %v533 = vshrl.u32 %v532, 7
    %v534 = vsub.s32 3, %v533
    %v535 = vrot.slane %v515, %v534
    %v536 = vlaneseq
    %v537 = vshrl.u32 %v536, 7
    %v538 = vsub.s32 4, %v537
    %v539 = vrot.slane %v515, %v538
    %v540 = vlaneseq
    %v541 = vshrl.u32 %v540, 7
    %v542 = vsub.s32 5, %v541
    %v543 = vrot.slane %v515, %v542
    %v544 = vlaneseq
    %v545 = vshrl.u32 %v544, 7
    %v546 = vsub.s32 6, %v545
    %v547 = vrot.slane %v515, %v546
    %v548 = vlaneseq
    %v549 = vshrl.u32 %v548, 7
    %v550 = vsub.s32 7, %v549
    %v551 = vrot.slane %v515, %v550
    %v552 = vlaneseq
    %v553 = vshrl.u32 %v552, 7
    %v554 = vsub.s32 0, %v553
    %v555 = vrot.slane %v517, %v554
    %v556 = vlaneseq
    %v557 = vshrl.u32 %v556, 7
    %v558 = vsub.s32 1, %v557
    %v559 = vrot.slane %v517, %v558
    %v560 = vlaneseq
    %v561 = vshrl.u32 %v560, 7
    %v562 = vsub.s32 2, %v561
    %v563 = vrot.slane %v517, %v562
    %v564 = vlaneseq
    %v565 = vshrl.u32 %v564, 7
    %v566 = vsub.s32 3, %v565
    %v567 = vrot.slane %v517, %v566
    %v568 = vlaneseq
    %v569 = vshrl.u32 %v568, 7
    %v570 = vsub.s32 4, %v569
    %v571 = vrot.slane %v517, %v570
    %v572 = vlaneseq
    %v573 = vshrl.u32 %v572, 7
    %v574 = vsub.s32 5, %v573
    %v575 = vrot.slane %v517, %v574
    %v576 = vlaneseq
    %v577 = vshrl.u32 %v576, 7
    %v578 = vsub.s32 6, %v577
    %v579 = vrot.slane %v517, %v578
    %v580 = vlaneseq
    %v581 = vshrl.u32 %v580, 7
    %v582 = vsub.s32 7, %v581
    %v583 = vrot.slane %v517, %v582
    %v600 = vmul.f32 %v333, %v523
    %v601 = vmul.f32 %v335, %v527
    %v602 = vmul.f32 %v337, %v531
    %v603 = vmul.f32 %v339, %v535
    %v604 = vmul.f32 %v341, %v539
    %v605 = vmul.f32 %v343, %v543
    %v606 = vmul.f32 %v345, %v547
    %v607 = vmul.f32 %v347, %v551
    %v608 = vmul.f32 %v349, %v555
    %v609 = vmul.f32 %v351, %v559
    %v610 = vmul.f32 %v353, %v563
    %v611 = vmul.f32 %v355, %v567
    %v612 = vmul.f32 %v357, %v571
    %v613 = vmul.f32 %v359, %v575
    %v614 = vmul.f32 %v361, %v579
    %v615 = vmul.f32 %v363, %v583
    %617 = vset.pattern.permute.xlu0 0
    %618 = vperm.xlu0 %617, %v600
    %v619 = vpop.permute.xlu0 %618
    %v620 = vlaneseq
    %v621 = vshrl.u32 %v620, 7
    %v622 = vsub.s32 %v139, %v621
    %v623 = vrot.slane %v619, %v622
    %v624 = vsel %vm227, %v623, 0
    %626 = vmatprep.subr.mxu0 0.0
    %627 = vmatpush1.msra.mxu0 %v34
    %628 = vmatprep.subr.mxu0 0.0
    %629 = vmatpush1.msra.mxu0 0.0
    %630 = vmatprep.subr.mxu0 0.0
    %631 = vmatpush1.msra.mxu0 0.0
    %632 = vmatprep.subr.mxu0 0.0
    %633 = vmatpush1.msra.mxu0 0.0
    %634 = vmatprep.subr.mxu0 0.0
    %635 = vmatpush1.msra.mxu0 0.0
    %636 = vmatprep.subr.mxu0 0.0
    %637 = vmatpush1.msra.mxu0 0.0
    %638 = vmatprep.subr.mxu0 0.0
    %639 = vmatpush1.msra.mxu0 0.0
    %640 = vmatprep.subr.mxu0 0.0
    %641 = vmatpush1.msra.mxu0 0.0
    %642 = vmatprep.subr.mxu0 0.0
    %643 = vmatpush1.msra.mxu0 0.0
    %644 = vmatprep.subr.mxu0 0.0
    %645 = vmatpush1.msra.mxu0 0.0
    %646 = vmatprep.subr.mxu0 0.0
    %647 = vmatpush1.msra.mxu0 0.0
    %648 = vmatprep.subr.mxu0 0.0
    %649 = vmatpush1.msra.mxu0 0.0
    %650 = vmatprep.subr.mxu0 0.0
    %651 = vmatpush1.msra.mxu0 0.0
    %652 = vmatprep.subr.mxu0 0.0
    %653 = vmatpush1.msra.mxu0 0.0
    %654 = vmatprep.subr.mxu0 0.0
    %655 = vmatpush1.msra.mxu0 0.0
    %656 = vmatprep.subr.mxu0 0.0
    %657 = vmatpush1.msra.mxu0 0.0
    %658 = vmatprep.subr.mxu0 0.0
    %659 = vmatpush1.msra.mxu0 0.0
    %660 = vmatprep.subr.mxu0 0.0
    %661 = vmatpush1.msra.mxu0 0.0
    %662 = vmatprep.subr.mxu0 0.0
    %663 = vmatpush1.msra.mxu0 0.0
    %664 = vmatprep.subr.mxu0 0.0
    %665 = vmatpush1.msra.mxu0 0.0
    %666 = vmatprep.subr.mxu0 0.0
    %667 = vmatpush1.msra.mxu0 0.0
    %668 = vmatprep.subr.mxu0 0.0
    %669 = vmatpush1.msra.mxu0 0.0
    %670 = vmatprep.subr.mxu0 0.0
    %671 = vmatpush1.msra.mxu0 0.0
    %672 = vmatprep.subr.mxu0 0.0
    %673 = vmatpush1.msra.mxu0 0.0
    %674 = vmatprep.subr.mxu0 0.0
    %675 = vmatpush1.msra.mxu0 0.0
    %676 = vmatprep.subr.mxu0 0.0
    %677 = vmatpush1.msra.mxu0 0.0
    %678 = vmatprep.subr.mxu0 0.0
    %679 = vmatpush1.msra.mxu0 0.0
    %680 = vmatprep.subr.mxu0 0.0
    %681 = vmatpush1.msra.mxu0 0.0
    %682 = vmatprep.subr.mxu0 0.0
    %683 = vmatpush1.msra.mxu0 0.0
    %684 = vmatprep.subr.mxu0 0.0
    %685 = vmatpush1.msra.mxu0 0.0
    %686 = vmatprep.subr.mxu0 0.0
    %687 = vmatpush1.msra.mxu0 0.0
    %688 = vmatprep.subr.mxu0 0.0
    %689 = vmatpush1.msra.mxu0 0.0
    %690 = vmatprep.mubr.f32.mxu0 0.0
    %691 = vmatmul.mubr.f32.gmra.mrb[0].mxu0 %v624
    %v692 = vpop.f32.mrb[0].mxu0
    %v693 = vadd.f32 0.0, %v692
    %v694 = vpop.f32.mrb[0].mxu0
    %695 = vdwg.mxu0
    %697 = vset.pattern.permute.xlu0 0
    %698 = vperm.xlu0 %697, %v601
    %v699 = vpop.permute.xlu0 %698
    %v700 = vlaneseq
    %v701 = vshrl.u32 %v700, 7
    %v702 = vsub.s32 %v139, %v701
    %v703 = vrot.slane %v699, %v702
    %v704 = vsel %vm227, %v703, 0
    %706 = vmatprep.subr.mxu0 0.0
    %707 = vmatpush1.msra.mxu0 %v35
    %708 = vmatprep.subr.mxu0 0.0
    %709 = vmatpush1.msra.mxu0 0.0
    %710 = vmatprep.subr.mxu0 0.0
    %711 = vmatpush1.msra.mxu0 0.0
    %712 = vmatprep.subr.mxu0 0.0
    %713 = vmatpush1.msra.mxu0 0.0
    %714 = vmatprep.subr.mxu0 0.0
    %715 = vmatpush1.msra.mxu0 0.0
    %716 = vmatprep.subr.mxu0 0.0
    %717 = vmatpush1.msra.mxu0 0.0
    %718 = vmatprep.subr.mxu0 0.0
    %719 = vmatpush1.msra.mxu0 0.0
    %720 = vmatprep.subr.mxu0 0.0
    %721 = vmatpush1.msra.mxu0 0.0
    %722 = vmatprep.subr.mxu0 0.0
    %723 = vmatpush1.msra.mxu0 0.0
    %724 = vmatprep.subr.mxu0 0.0
    %725 = vmatpush1.msra.mxu0 0.0
    %726 = vmatprep.subr.mxu0 0.0
    %727 = vmatpush1.msra.mxu0 0.0
    %728 = vmatprep.subr.mxu0 0.0
    %729 = vmatpush1.msra.mxu0 0.0
    %730 = vmatprep.subr.mxu0 0.0
    %731 = vmatpush1.msra.mxu0 0.0
    %732 = vmatprep.subr.mxu0 0.0
    %733 = vmatpush1.msra.mxu0 0.0
    %734 = vmatprep.subr.mxu0 0.0
    %735 = vmatpush1.msra.mxu0 0.0
    %736 = vmatprep.subr.mxu0 0.0
    %737 = vmatpush1.msra.mxu0 0.0
    %738 = vmatprep.subr.mxu0 0.0
    %739 = vmatpush1.msra.mxu0 0.0
    %740 = vmatprep.subr.mxu0 0.0
    %741 = vmatpush1.msra.mxu0 0.0
    %742 = vmatprep.subr.mxu0 0.0
    %743 = vmatpush1.msra.mxu0 0.0
    %744 = vmatprep.subr.mxu0 0.0
    %745 = vmatpush1.msra.mxu0 0.0
    %746 = vmatprep.subr.mxu0 0.0
    %747 = vmatpush1.msra.mxu0 0.0
    %748 = vmatprep.subr.mxu0 0.0
    %749 = vmatpush1.msra.mxu0 0.0
    %750 = vmatprep.subr.mxu0 0.0
    %751 = vmatpush1.msra.mxu0 0.0
    %752 = vmatprep.subr.mxu0 0.0
    %753 = vmatpush1.msra.mxu0 0.0
    %754 = vmatprep.subr.mxu0 0.0
    %755 = vmatpush1.msra.mxu0 0.0
    %756 = vmatprep.subr.mxu0 0.0
    %757 = vmatpush1.msra.mxu0 0.0
    %758 = vmatprep.subr.mxu0 0.0
    %759 = vmatpush1.msra.mxu0 0.0
    %760 = vmatprep.subr.mxu0 0.0
    %761 = vmatpush1.msra.mxu0 0.0
    %762 = vmatprep.subr.mxu0 0.0
    %763 = vmatpush1.msra.mxu0 0.0
    %764 = vmatprep.subr.mxu0 0.0
    %765 = vmatpush1.msra.mxu0 0.0
    %766 = vmatprep.subr.mxu0 0.0
    %767 = vmatpush1.msra.mxu0 0.0
    %768 = vmatprep.subr.mxu0 0.0
    %769 = vmatpush1.msra.mxu0 0.0
    %770 = vmatprep.mubr.f32.mxu0 0.0
    %771 = vmatmul.mubr.f32.gmra.mrb[0].mxu0 %v704
    %v772 = vpop.f32.mrb[0].mxu0
    %v773 = vadd.f32 0.0, %v772
    %v774 = vpop.f32.mrb[0].mxu0
    %775 = vdwg.mxu0
    %777 = vset.pattern.permute.xlu0 0
    %778 = vperm.xlu0 %777, %v602
    %v779 = vpop.permute.xlu0 %778
    %v780 = vlaneseq
    %v781 = vshrl.u32 %v780, 7
    %v782 = vsub.s32 %v139, %v781
    %v783 = vrot.slane %v779, %v782
    %v784 = vsel %vm227, %v783, 0
    %786 = vmatprep.subr.mxu0 0.0
    %787 = vmatpush1.msra.mxu0 %v36
    %788 = vmatprep.subr.mxu0 0.0
    %789 = vmatpush1.msra.mxu0 0.0
    %790 = vmatprep.subr.mxu0 0.0
    %791 = vmatpush1.msra.mxu0 0.0
    %792 = vmatprep.subr.mxu0 0.0
    %793 = vmatpush1.msra.mxu0 0.0
    %794 = vmatprep.subr.mxu0 0.0
    %795 = vmatpush1.msra.mxu0 0.0
    %796 = vmatprep.subr.mxu0 0.0
    %797 = vmatpush1.msra.mxu0 0.0
    %798 = vmatprep.subr.mxu0 0.0
    %799 = vmatpush1.msra.mxu0 0.0
    %800 = vmatprep.subr.mxu0 0.0
    %801 = vmatpush1.msra.mxu0 0.0
    %802 = vmatprep.subr.mxu0 0.0
    %803 = vmatpush1.msra.mxu0 0.0
    %804 = vmatprep.subr.mxu0 0.0
    %805 = vmatpush1.msra.mxu0 0.0
    %806 = vmatprep.subr.mxu0 0.0
    %807 = vmatpush1.msra.mxu0 0.0
    %808 = vmatprep.subr.mxu0 0.0
    %809 = vmatpush1.msra.mxu0 0.0
    %810 = vmatprep.subr.mxu0 0.0
    %811 = vmatpush1.msra.mxu0 0.0
    %812 = vmatprep.subr.mxu0 0.0
    %813 = vmatpush1.msra.mxu0 0.0
    %814 = vmatprep.subr.mxu0 0.0
    %815 = vmatpush1.msra.mxu0 0.0
    %816 = vmatprep.subr.mxu0 0.0
    %817 = vmatpush1.msra.mxu0 0.0
    %818 = vmatprep.subr.mxu0 0.0
    %819 = vmatpush1.msra.mxu0 0.0
    %820 = vmatprep.subr.mxu0 0.0
    %821 = vmatpush1.msra.mxu0 0.0
    %822 = vmatprep.subr.mxu0 0.0
    %823 = vmatpush1.msra.mxu0 0.0
    %824 = vmatprep.subr.mxu0 0.0
    %825 = vmatpush1.msra.mxu0 0.0
    %826 = vmatprep.subr.mxu0 0.0
    %827 = vmatpush1.msra.mxu0 0.0
    %828 = vmatprep.subr.mxu0 0.0
    %829 = vmatpush1.msra.mxu0 0.0
    %830 = vmatprep.subr.mxu0 0.0
    %831 = vmatpush1.msra.mxu0 0.0
    %832 = vmatprep.subr.mxu0 0.0
    %833 = vmatpush1.msra.mxu0 0.0
    %834 = vmatprep.subr.mxu0 0.0
    %835 = vmatpush1.msra.mxu0 0.0
    %836 = vmatprep.subr.mxu0 0.0
    %837 = vmatpush1.msra.mxu0 0.0
    %838 = vmatprep.subr.mxu0 0.0
    %839 = vmatpush1.msra.mxu0 0.0
    %840 = vmatprep.subr.mxu0 0.0
    %841 = vmatpush1.msra.mxu0 0.0
    %842 = vmatprep.subr.mxu0 0.0
    %843 = vmatpush1.msra.mxu0 0.0
    %844 = vmatprep.subr.mxu0 0.0
    %845 = vmatpush1.msra.mxu0 0.0
    %846 = vmatprep.subr.mxu0 0.0
    %847 = vmatpush1.msra.mxu0 0.0
    %848 = vmatprep.subr.mxu0 0.0
    %849 = vmatpush1.msra.mxu0 0.0
    %850 = vmatprep.mubr.f32.mxu0 0.0
    %851 = vmatmul.mubr.f32.gmra.mrb[0].mxu0 %v784
    %v852 = vpop.f32.mrb[0].mxu0
    %v853 = vadd.f32 0.0, %v852
    %v854 = vpop.f32.mrb[0].mxu0
    %855 = vdwg.mxu0
    %857 = vset.pattern.permute.xlu0 0
    %858 = vperm.xlu0 %857, %v603
    %v859 = vpop.permute.xlu0 %858
    %v860 = vlaneseq
    %v861 = vshrl.u32 %v860, 7
    %v862 = vsub.s32 %v139, %v861
    %v863 = vrot.slane %v859, %v862
    %v864 = vsel %vm227, %v863, 0
    %866 = vmatprep.subr.mxu0 0.0
    %867 = vmatpush1.msra.mxu0 %v37
    %868 = vmatprep.subr.mxu0 0.0
    %869 = vmatpush1.msra.mxu0 0.0
    %870 = vmatprep.subr.mxu0 0.0
    %871 = vmatpush1.msra.mxu0 0.0
    %872 = vmatprep.subr.mxu0 0.0
    %873 = vmatpush1.msra.mxu0 0.0
    %874 = vmatprep.subr.mxu0 0.0
    %875 = vmatpush1.msra.mxu0 0.0
    %876 = vmatprep.subr.mxu0 0.0
    %877 = vmatpush1.msra.mxu0 0.0
    %878 = vmatprep.subr.mxu0 0.0
    %879 = vmatpush1.msra.mxu0 0.0
    %880 = vmatprep.subr.mxu0 0.0
    %881 = vmatpush1.msra.mxu0 0.0
    %882 = vmatprep.subr.mxu0 0.0
    %883 = vmatpush1.msra.mxu0 0.0
    %884 = vmatprep.subr.mxu0 0.0
    %885 = vmatpush1.msra.mxu0 0.0
    %886 = vmatprep.subr.mxu0 0.0
    %887 = vmatpush1.msra.mxu0 0.0
    %888 = vmatprep.subr.mxu0 0.0
    %889 = vmatpush1.msra.mxu0 0.0
    %890 = vmatprep.subr.mxu0 0.0
    %891 = vmatpush1.msra.mxu0 0.0
    %892 = vmatprep.subr.mxu0 0.0
    %893 = vmatpush1.msra.mxu0 0.0
    %894 = vmatprep.subr.mxu0 0.0
    %895 = vmatpush1.msra.mxu0 0.0
    %896 = vmatprep.subr.mxu0 0.0
    %897 = vmatpush1.msra.mxu0 0.0
    %898 = vmatprep.subr.mxu0 0.0
    %899 = vmatpush1.msra.mxu0 0.0
    %900 = vmatprep.subr.mxu0 0.0
    %901 = vmatpush1.msra.mxu0 0.0
    %902 = vmatprep.subr.mxu0 0.0
    %903 = vmatpush1.msra.mxu0 0.0
    %904 = vmatprep.subr.mxu0 0.0
    %905 = vmatpush1.msra.mxu0 0.0
    %906 = vmatprep.subr.mxu0 0.0
    %907 = vmatpush1.msra.mxu0 0.0
    %908 = vmatprep.subr.mxu0 0.0
    %909 = vmatpush1.msra.mxu0 0.0
    %910 = vmatprep.subr.mxu0 0.0
    %911 = vmatpush1.msra.mxu0 0.0
    %912 = vmatprep.subr.mxu0 0.0
    %913 = vmatpush1.msra.mxu0 0.0
    %914 = vmatprep.subr.mxu0 0.0
    %915 = vmatpush1.msra.mxu0 0.0
    %916 = vmatprep.subr.mxu0 0.0
    %917 = vmatpush1.msra.mxu0 0.0
    %918 = vmatprep.subr.mxu0 0.0
    %919 = vmatpush1.msra.mxu0 0.0
    %920 = vmatprep.subr.mxu0 0.0
    %921 = vmatpush1.msra.mxu0 0.0
    %922 = vmatprep.subr.mxu0 0.0
    %923 = vmatpush1.msra.mxu0 0.0
    %924 = vmatprep.subr.mxu0 0.0
    %925 = vmatpush1.msra.mxu0 0.0
    %926 = vmatprep.subr.mxu0 0.0
    %927 = vmatpush1.msra.mxu0 0.0
    %928 = vmatprep.subr.mxu0 0.0
    %929 = vmatpush1.msra.mxu0 0.0
    %930 = vmatprep.mubr.f32.mxu0 0.0
    %931 = vmatmul.mubr.f32.gmra.mrb[0].mxu0 %v864
    %v932 = vpop.f32.mrb[0].mxu0
    %v933 = vadd.f32 0.0, %v932
    %v934 = vpop.f32.mrb[0].mxu0
    %935 = vdwg.mxu0
    %937 = vset.pattern.permute.xlu0 0
    %938 = vperm.xlu0 %937, %v604
    %v939 = vpop.permute.xlu0 %938
    %v940 = vlaneseq
    %v941 = vshrl.u32 %v940, 7
    %v942 = vsub.s32 %v139, %v941
    %v943 = vrot.slane %v939, %v942
    %v944 = vsel %vm227, %v943, 0
    %946 = vmatprep.subr.mxu0 0.0
    %947 = vmatpush1.msra.mxu0 %v38
    %948 = vmatprep.subr.mxu0 0.0
    %949 = vmatpush1.msra.mxu0 0.0
    %950 = vmatprep.subr.mxu0 0.0
    %951 = vmatpush1.msra.mxu0 0.0
    %952 = vmatprep.subr.mxu0 0.0
    %953 = vmatpush1.msra.mxu0 0.0
    %954 = vmatprep.subr.mxu0 0.0
    %955 = vmatpush1.msra.mxu0 0.0
    %956 = vmatprep.subr.mxu0 0.0
    %957 = vmatpush1.msra.mxu0 0.0
    %958 = vmatprep.subr.mxu0 0.0
    %959 = vmatpush1.msra.mxu0 0.0
    %960 = vmatprep.subr.mxu0 0.0
    %961 = vmatpush1.msra.mxu0 0.0
    %962 = vmatprep.subr.mxu0 0.0
    %963 = vmatpush1.msra.mxu0 0.0
    %964 = vmatprep.subr.mxu0 0.0
    %965 = vmatpush1.msra.mxu0 0.0
    %966 = vmatprep.subr.mxu0 0.0
    %967 = vmatpush1.msra.mxu0 0.0
    %968 = vmatprep.subr.mxu0 0.0
    %969 = vmatpush1.msra.mxu0 0.0
    %970 = vmatprep.subr.mxu0 0.0
    %971 = vmatpush1.msra.mxu0 0.0
    %972 = vmatprep.subr.mxu0 0.0
    %973 = vmatpush1.msra.mxu0 0.0
    %974 = vmatprep.subr.mxu0 0.0
    %975 = vmatpush1.msra.mxu0 0.0
    %976 = vmatprep.subr.mxu0 0.0
    %977 = vmatpush1.msra.mxu0 0.0
    %978 = vmatprep.subr.mxu0 0.0
    %979 = vmatpush1.msra.mxu0 0.0
    %980 = vmatprep.subr.mxu0 0.0
    %981 = vmatpush1.msra.mxu0 0.0
    %982 = vmatprep.subr.mxu0 0.0
    %983 = vmatpush1.msra.mxu0 0.0
    %984 = vmatprep.subr.mxu0 0.0
    %985 = vmatpush1.msra.mxu0 0.0
    %986 = vmatprep.subr.mxu0 0.0
    %987 = vmatpush1.msra.mxu0 0.0
    %988 = vmatprep.subr.mxu0 0.0
    %989 = vmatpush1.msra.mxu0 0.0
    %990 = vmatprep.subr.mxu0 0.0
    %991 = vmatpush1.msra.mxu0 0.0
    %992 = vmatprep.subr.mxu0 0.0
    %993 = vmatpush1.msra.mxu0 0.0
    %994 = vmatprep.subr.mxu0 0.0
    %995 = vmatpush1.msra.mxu0 0.0
    %996 = vmatprep.subr.mxu0 0.0
    %997 = vmatpush1.msra.mxu0 0.0
    %998 = vmatprep.subr.mxu0 0.0
    %999 = vmatpush1.msra.mxu0 0.0
    %1000 = vmatprep.subr.mxu0 0.0
    %1001 = vmatpush1.msra.mxu0 0.0
    %1002 = vmatprep.subr.mxu0 0.0
    %1003 = vmatpush1.msra.mxu0 0.0
    %1004 = vmatprep.subr.mxu0 0.0
    %1005 = vmatpush1.msra.mxu0 0.0
    %1006 = vmatprep.subr.mxu0 0.0
    %1007 = vmatpush1.msra.mxu0 0.0
    %1008 = vmatprep.subr.mxu0 0.0
    %1009 = vmatpush1.msra.mxu0 0.0
    %1010 = vmatprep.mubr.f32.mxu0 0.0
    %1011 = vmatmul.mubr.f32.gmra.mrb[0].mxu0 %v944
    %v1012 = vpop.f32.mrb[0].mxu0
    %v1013 = vadd.f32 0.0, %v1012
    %v1014 = vpop.f32.mrb[0].mxu0
    %1015 = vdwg.mxu0
    %1017 = vset.pattern.permute.xlu0 0
    %1018 = vperm.xlu0 %1017, %v605
    %v1019 = vpop.permute.xlu0 %1018
    %v1020 = vlaneseq
    %v1021 = vshrl.u32 %v1020, 7
    %v1022 = vsub.s32 %v139, %v1021
    %v1023 = vrot.slane %v1019, %v1022
    %v1024 = vsel %vm227, %v1023, 0
    %1026 = vmatprep.subr.mxu0 0.0
    %1027 = vmatpush1.msra.mxu0 %v39
    %1028 = vmatprep.subr.mxu0 0.0
    %1029 = vmatpush1.msra.mxu0 0.0
    %1030 = vmatprep.subr.mxu0 0.0
    %1031 = vmatpush1.msra.mxu0 0.0
    %1032 = vmatprep.subr.mxu0 0.0
    %1033 = vmatpush1.msra.mxu0 0.0
    %1034 = vmatprep.subr.mxu0 0.0
    %1035 = vmatpush1.msra.mxu0 0.0
    %1036 = vmatprep.subr.mxu0 0.0
    %1037 = vmatpush1.msra.mxu0 0.0
    %1038 = vmatprep.subr.mxu0 0.0
    %1039 = vmatpush1.msra.mxu0 0.0
    %1040 = vmatprep.subr.mxu0 0.0
    %1041 = vmatpush1.msra.mxu0 0.0
    %1042 = vmatprep.subr.mxu0 0.0
    %1043 = vmatpush1.msra.mxu0 0.0
    %1044 = vmatprep.subr.mxu0 0.0
    %1045 = vmatpush1.msra.mxu0 0.0
    %1046 = vmatprep.subr.mxu0 0.0
    %1047 = vmatpush1.msra.mxu0 0.0
    %1048 = vmatprep.subr.mxu0 0.0
    %1049 = vmatpush1.msra.mxu0 0.0
    %1050 = vmatprep.subr.mxu0 0.0
    %1051 = vmatpush1.msra.mxu0 0.0
    %1052 = vmatprep.subr.mxu0 0.0
    %1053 = vmatpush1.msra.mxu0 0.0
    %1054 = vmatprep.subr.mxu0 0.0
    %1055 = vmatpush1.msra.mxu0 0.0
    %1056 = vmatprep.subr.mxu0 0.0
    %1057 = vmatpush1.msra.mxu0 0.0
    %1058 = vmatprep.subr.mxu0 0.0
    %1059 = vmatpush1.msra.mxu0 0.0
    %1060 = vmatprep.subr.mxu0 0.0
    %1061 = vmatpush1.msra.mxu0 0.0
    %1062 = vmatprep.subr.mxu0 0.0
    %1063 = vmatpush1.msra.mxu0 0.0
    %1064 = vmatprep.subr.mxu0 0.0
    %1065 = vmatpush1.msra.mxu0 0.0
    %1066 = vmatprep.subr.mxu0 0.0
    %1067 = vmatpush1.msra.mxu0 0.0
    %1068 = vmatprep.subr.mxu0 0.0
    %1069 = vmatpush1.msra.mxu0 0.0
    %1070 = vmatprep.subr.mxu0 0.0
    %1071 = vmatpush1.msra.mxu0 0.0
    %1072 = vmatprep.subr.mxu0 0.0
    %1073 = vmatpush1.msra.mxu0 0.0
    %1074 = vmatprep.subr.mxu0 0.0
    %1075 = vmatpush1.msra.mxu0 0.0
    %1076 = vmatprep.subr.mxu0 0.0
    %1077 = vmatpush1.msra.mxu0 0.0
    %1078 = vmatprep.subr.mxu0 0.0
    %1079 = vmatpush1.msra.mxu0 0.0
    %1080 = vmatprep.subr.mxu0 0.0
    %1081 = vmatpush1.msra.mxu0 0.0
    %1082 = vmatprep.subr.mxu0 0.0
    %1083 = vmatpush1.msra.mxu0 0.0
    %1084 = vmatprep.subr.mxu0 0.0
    %1085 = vmatpush1.msra.mxu0 0.0
    %1086 = vmatprep.subr.mxu0 0.0
    %1087 = vmatpush1.msra.mxu0 0.0
    %1088 = vmatprep.subr.mxu0 0.0
    %1089 = vmatpush1.msra.mxu0 0.0
    %1090 = vmatprep.mubr.f32.mxu0 0.0
    %1091 = vmatmul.mubr.f32.gmra.mrb[0].mxu0 %v1024
    %v1092 = vpop.f32.mrb[0].mxu0
    %v1093 = vadd.f32 0.0, %v1092
    %v1094 = vpop.f32.mrb[0].mxu0
    %1095 = vdwg.mxu0
    %1097 = vset.pattern.permute.xlu0 0
    %1098 = vperm.xlu0 %1097, %v606
    %v1099 = vpop.permute.xlu0 %1098
    %v1100 = vlaneseq
    %v1101 = vshrl.u32 %v1100, 7
    %v1102 = vsub.s32 %v139, %v1101
    %v1103 = vrot.slane %v1099, %v1102
    %v1104 = vsel %vm227, %v1103, 0
    %1106 = vmatprep.subr.mxu0 0.0
    %1107 = vmatpush1.msra.mxu0 %v40
    %1108 = vmatprep.subr.mxu0 0.0
    %1109 = vmatpush1.msra.mxu0 0.0
    %1110 = vmatprep.subr.mxu0 0.0
    %1111 = vmatpush1.msra.mxu0 0.0
    %1112 = vmatprep.subr.mxu0 0.0
    %1113 = vmatpush1.msra.mxu0 0.0
    %1114 = vmatprep.subr.mxu0 0.0
    %1115 = vmatpush1.msra.mxu0 0.0
    %1116 = vmatprep.subr.mxu0 0.0
    %1117 = vmatpush1.msra.mxu0 0.0
    %1118 = vmatprep.subr.mxu0 0.0
    %1119 = vmatpush1.msra.mxu0 0.0
    %1120 = vmatprep.subr.mxu0 0.0
    %1121 = vmatpush1.msra.mxu0 0.0
    %1122 = vmatprep.subr.mxu0 0.0
    %1123 = vmatpush1.msra.mxu0 0.0
    %1124 = vmatprep.subr.mxu0 0.0
    %1125 = vmatpush1.msra.mxu0 0.0
    %1126 = vmatprep.subr.mxu0 0.0
    %1127 = vmatpush1.msra.mxu0 0.0
    %1128 = vmatprep.subr.mxu0 0.0
    %1129 = vmatpush1.msra.mxu0 0.0
    %1130 = vmatprep.subr.mxu0 0.0
    %1131 = vmatpush1.msra.mxu0 0.0
    %1132 = vmatprep.subr.mxu0 0.0
    %1133 = vmatpush1.msra.mxu0 0.0
    %1134 = vmatprep.subr.mxu0 0.0
    %1135 = vmatpush1.msra.mxu0 0.0
    %1136 = vmatprep.subr.mxu0 0.0
    %1137 = vmatpush1.msra.mxu0 0.0
    %1138 = vmatprep.subr.mxu0 0.0
    %1139 = vmatpush1.msra.mxu0 0.0
    %1140 = vmatprep.subr.mxu0 0.0
    %1141 = vmatpush1.msra.mxu0 0.0
    %1142 = vmatprep.subr.mxu0 0.0
    %1143 = vmatpush1.msra.mxu0 0.0
    %1144 = vmatprep.subr.mxu0 0.0
    %1145 = vmatpush1.msra.mxu0 0.0
    %1146 = vmatprep.subr.mxu0 0.0
    %1147 = vmatpush1.msra.mxu0 0.0
    %1148 = vmatprep.subr.mxu0 0.0
    %1149 = vmatpush1.msra.mxu0 0.0
    %1150 = vmatprep.subr.mxu0 0.0
    %1151 = vmatpush1.msra.mxu0 0.0
    %1152 = vmatprep.subr.mxu0 0.0
    %1153 = vmatpush1.msra.mxu0 0.0
    %1154 = vmatprep.subr.mxu0 0.0
    %1155 = vmatpush1.msra.mxu0 0.0
    %1156 = vmatprep.subr.mxu0 0.0
    %1157 = vmatpush1.msra.mxu0 0.0
    %1158 = vmatprep.subr.mxu0 0.0
    %1159 = vmatpush1.msra.mxu0 0.0
    %1160 = vmatprep.subr.mxu0 0.0
    %1161 = vmatpush1.msra.mxu0 0.0
    %1162 = vmatprep.subr.mxu0 0.0
    %1163 = vmatpush1.msra.mxu0 0.0
    %1164 = vmatprep.subr.mxu0 0.0
    %1165 = vmatpush1.msra.mxu0 0.0
    %1166 = vmatprep.subr.mxu0 0.0
    %1167 = vmatpush1.msra.mxu0 0.0
    %1168 = vmatprep.subr.mxu0 0.0
    %1169 = vmatpush1.msra.mxu0 0.0
    %1170 = vmatprep.mubr.f32.mxu0 0.0
    %1171 = vmatmul.mubr.f32.gmra.mrb[0].mxu0 %v1104
    %v1172 = vpop.f32.mrb[0].mxu0
    %v1173 = vadd.f32 0.0, %v1172
    %v1174 = vpop.f32.mrb[0].mxu0
    %1175 = vdwg.mxu0
    %1177 = vset.pattern.permute.xlu0 0
    %1178 = vperm.xlu0 %1177, %v607
    %v1179 = vpop.permute.xlu0 %1178
    %v1180 = vlaneseq
    %v1181 = vshrl.u32 %v1180, 7
    %v1182 = vsub.s32 %v139, %v1181
    %v1183 = vrot.slane %v1179, %v1182
    %v1184 = vsel %vm227, %v1183, 0
    %1186 = vmatprep.subr.mxu0 0.0
    %1187 = vmatpush1.msra.mxu0 %v41
    %1188 = vmatprep.subr.mxu0 0.0
    %1189 = vmatpush1.msra.mxu0 0.0
    %1190 = vmatprep.subr.mxu0 0.0
    %1191 = vmatpush1.msra.mxu0 0.0
    %1192 = vmatprep.subr.mxu0 0.0
    %1193 = vmatpush1.msra.mxu0 0.0
    %1194 = vmatprep.subr.mxu0 0.0
    %1195 = vmatpush1.msra.mxu0 0.0
    %1196 = vmatprep.subr.mxu0 0.0
    %1197 = vmatpush1.msra.mxu0 0.0
    %1198 = vmatprep.subr.mxu0 0.0
    %1199 = vmatpush1.msra.mxu0 0.0
    %1200 = vmatprep.subr.mxu0 0.0
    %1201 = vmatpush1.msra.mxu0 0.0
    %1202 = vmatprep.subr.mxu0 0.0
    %1203 = vmatpush1.msra.mxu0 0.0
    %1204 = vmatprep.subr.mxu0 0.0
    %1205 = vmatpush1.msra.mxu0 0.0
    %1206 = vmatprep.subr.mxu0 0.0
    %1207 = vmatpush1.msra.mxu0 0.0
    %1208 = vmatprep.subr.mxu0 0.0
    %1209 = vmatpush1.msra.mxu0 0.0
    %1210 = vmatprep.subr.mxu0 0.0
    %1211 = vmatpush1.msra.mxu0 0.0
    %1212 = vmatprep.subr.mxu0 0.0
    %1213 = vmatpush1.msra.mxu0 0.0
    %1214 = vmatprep.subr.mxu0 0.0
    %1215 = vmatpush1.msra.mxu0 0.0
    %1216 = vmatprep.subr.mxu0 0.0
    %1217 = vmatpush1.msra.mxu0 0.0
    %1218 = vmatprep.subr.mxu0 0.0
    %1219 = vmatpush1.msra.mxu0 0.0
    %1220 = vmatprep.subr.mxu0 0.0
    %1221 = vmatpush1.msra.mxu0 0.0
    %1222 = vmatprep.subr.mxu0 0.0
    %1223 = vmatpush1.msra.mxu0 0.0
    %1224 = vmatprep.subr.mxu0 0.0
    %1225 = vmatpush1.msra.mxu0 0.0
    %1226 = vmatprep.subr.mxu0 0.0
    %1227 = vmatpush1.msra.mxu0 0.0
    %1228 = vmatprep.subr.mxu0 0.0
    %1229 = vmatpush1.msra.mxu0 0.0
    %1230 = vmatprep.subr.mxu0 0.0
    %1231 = vmatpush1.msra.mxu0 0.0
    %1232 = vmatprep.subr.mxu0 0.0
    %1233 = vmatpush1.msra.mxu0 0.0
    %1234 = vmatprep.subr.mxu0 0.0
    %1235 = vmatpush1.msra.mxu0 0.0
    %1236 = vmatprep.subr.mxu0 0.0
    %1237 = vmatpush1.msra.mxu0 0.0
    %1238 = vmatprep.subr.mxu0 0.0
    %1239 = vmatpush1.msra.mxu0 0.0
    %1240 = vmatprep.subr.mxu0 0.0
    %1241 = vmatpush1.msra.mxu0 0.0
    %1242 = vmatprep.subr.mxu0 0.0
    %1243 = vmatpush1.msra.mxu0 0.0
    %1244 = vmatprep.subr.mxu0 0.0
    %1245 = vmatpush1.msra.mxu0 0.0
    %1246 = vmatprep.subr.mxu0 0.0
    %1247 = vmatpush1.msra.mxu0 0.0
    %1248 = vmatprep.subr.mxu0 0.0
    %1249 = vmatpush1.msra.mxu0 0.0
    %1250 = vmatprep.mubr.f32.mxu0 0.0
    %1251 = vmatmul.mubr.f32.gmra.mrb[0].mxu0 %v1184
    %v1252 = vpop.f32.mrb[0].mxu0
    %v1253 = vadd.f32 0.0, %v1252
    %v1254 = vpop.f32.mrb[0].mxu0
    %1255 = vdwg.mxu0
    %1257 = vset.pattern.permute.xlu0 0
    %1258 = vperm.xlu0 %1257, %v608
    %v1259 = vpop.permute.xlu0 %1258
    %v1260 = vlaneseq
    %v1261 = vshrl.u32 %v1260, 7
    %v1262 = vsub.s32 %v139, %v1261
    %v1263 = vrot.slane %v1259, %v1262
    %v1264 = vsel %vm227, %v1263, 0
    %1266 = vmatprep.subr.mxu0 0.0
    %1267 = vmatpush1.msra.mxu0 %v42
    %1268 = vmatprep.subr.mxu0 0.0
    %1269 = vmatpush1.msra.mxu0 0.0
    %1270 = vmatprep.subr.mxu0 0.0
    %1271 = vmatpush1.msra.mxu0 0.0
    %1272 = vmatprep.subr.mxu0 0.0
    %1273 = vmatpush1.msra.mxu0 0.0
    %1274 = vmatprep.subr.mxu0 0.0
    %1275 = vmatpush1.msra.mxu0 0.0
    %1276 = vmatprep.subr.mxu0 0.0
    %1277 = vmatpush1.msra.mxu0 0.0
    %1278 = vmatprep.subr.mxu0 0.0
    %1279 = vmatpush1.msra.mxu0 0.0
    %1280 = vmatprep.subr.mxu0 0.0
    %1281 = vmatpush1.msra.mxu0 0.0
    %1282 = vmatprep.subr.mxu0 0.0
    %1283 = vmatpush1.msra.mxu0 0.0
    %1284 = vmatprep.subr.mxu0 0.0
    %1285 = vmatpush1.msra.mxu0 0.0
    %1286 = vmatprep.subr.mxu0 0.0
    %1287 = vmatpush1.msra.mxu0 0.0
    %1288 = vmatprep.subr.mxu0 0.0
    %1289 = vmatpush1.msra.mxu0 0.0
    %1290 = vmatprep.subr.mxu0 0.0
    %1291 = vmatpush1.msra.mxu0 0.0
    %1292 = vmatprep.subr.mxu0 0.0
    %1293 = vmatpush1.msra.mxu0 0.0
    %1294 = vmatprep.subr.mxu0 0.0
    %1295 = vmatpush1.msra.mxu0 0.0
    %1296 = vmatprep.subr.mxu0 0.0
    %1297 = vmatpush1.msra.mxu0 0.0
    %1298 = vmatprep.subr.mxu0 0.0
    %1299 = vmatpush1.msra.mxu0 0.0
    %1300 = vmatprep.subr.mxu0 0.0
    %1301 = vmatpush1.msra.mxu0 0.0
    %1302 = vmatprep.subr.mxu0 0.0
    %1303 = vmatpush1.msra.mxu0 0.0
    %1304 = vmatprep.subr.mxu0 0.0
    %1305 = vmatpush1.msra.mxu0 0.0
    %1306 = vmatprep.subr.mxu0 0.0
    %1307 = vmatpush1.msra.mxu0 0.0
    %1308 = vmatprep.subr.mxu0 0.0
    %1309 = vmatpush1.msra.mxu0 0.0
    %1310 = vmatprep.subr.mxu0 0.0
    %1311 = vmatpush1.msra.mxu0 0.0
    %1312 = vmatprep.subr.mxu0 0.0
    %1313 = vmatpush1.msra.mxu0 0.0
    %1314 = vmatprep.subr.mxu0 0.0
    %1315 = vmatpush1.msra.mxu0 0.0
    %1316 = vmatprep.subr.mxu0 0.0
    %1317 = vmatpush1.msra.mxu0 0.0
    %1318 = vmatprep.subr.mxu0 0.0
    %1319 = vmatpush1.msra.mxu0 0.0
    %1320 = vmatprep.subr.mxu0 0.0
    %1321 = vmatpush1.msra.mxu0 0.0
    %1322 = vmatprep.subr.mxu0 0.0
    %1323 = vmatpush1.msra.mxu0 0.0
    %1324 = vmatprep.subr.mxu0 0.0
    %1325 = vmatpush1.msra.mxu0 0.0
    %1326 = vmatprep.subr.mxu0 0.0
    %1327 = vmatpush1.msra.mxu0 0.0
    %1328 = vmatprep.subr.mxu0 0.0
    %1329 = vmatpush1.msra.mxu0 0.0
    %1330 = vmatprep.mubr.f32.mxu0 0.0
    %1331 = vmatmul.mubr.f32.gmra.mrb[0].mxu0 %v1264
    %v1332 = vpop.f32.mrb[0].mxu0
    %v1333 = vadd.f32 0.0, %v1332
    %v1334 = vpop.f32.mrb[0].mxu0
    %1335 = vdwg.mxu0
    %1337 = vset.pattern.permute.xlu0 0
    %1338 = vperm.xlu0 %1337, %v609
    %v1339 = vpop.permute.xlu0 %1338
    %v1340 = vlaneseq
    %v1341 = vshrl.u32 %v1340, 7
    %v1342 = vsub.s32 %v139, %v1341
    %v1343 = vrot.slane %v1339, %v1342
    %v1344 = vsel %vm227, %v1343, 0
    %1346 = vmatprep.subr.mxu0 0.0
    %1347 = vmatpush1.msra.mxu0 %v43
    %1348 = vmatprep.subr.mxu0 0.0
    %1349 = vmatpush1.msra.mxu0 0.0
    %1350 = vmatprep.subr.mxu0 0.0
    %1351 = vmatpush1.msra.mxu0 0.0
    %1352 = vmatprep.subr.mxu0 0.0
    %1353 = vmatpush1.msra.mxu0 0.0
    %1354 = vmatprep.subr.mxu0 0.0
    %1355 = vmatpush1.msra.mxu0 0.0
    %1356 = vmatprep.subr.mxu0 0.0
    %1357 = vmatpush1.msra.mxu0 0.0
    %1358 = vmatprep.subr.mxu0 0.0
    %1359 = vmatpush1.msra.mxu0 0.0
    %1360 = vmatprep.subr.mxu0 0.0
    %1361 = vmatpush1.msra.mxu0 0.0
    %1362 = vmatprep.subr.mxu0 0.0
    %1363 = vmatpush1.msra.mxu0 0.0
    %1364 = vmatprep.subr.mxu0 0.0
    %1365 = vmatpush1.msra.mxu0 0.0
    %1366 = vmatprep.subr.mxu0 0.0
    %1367 = vmatpush1.msra.mxu0 0.0
    %1368 = vmatprep.subr.mxu0 0.0
    %1369 = vmatpush1.msra.mxu0 0.0
    %1370 = vmatprep.subr.mxu0 0.0
    %1371 = vmatpush1.msra.mxu0 0.0
    %1372 = vmatprep.subr.mxu0 0.0
    %1373 = vmatpush1.msra.mxu0 0.0
    %1374 = vmatprep.subr.mxu0 0.0
    %1375 = vmatpush1.msra.mxu0 0.0
    %1376 = vmatprep.subr.mxu0 0.0
    %1377 = vmatpush1.msra.mxu0 0.0
    %1378 = vmatprep.subr.mxu0 0.0
    %1379 = vmatpush1.msra.mxu0 0.0
    %1380 = vmatprep.subr.mxu0 0.0
    %1381 = vmatpush1.msra.mxu0 0.0
    %1382 = vmatprep.subr.mxu0 0.0
    %1383 = vmatpush1.msra.mxu0 0.0
    %1384 = vmatprep.subr.mxu0 0.0
    %1385 = vmatpush1.msra.mxu0 0.0
    %1386 = vmatprep.subr.mxu0 0.0
    %1387 = vmatpush1.msra.mxu0 0.0
    %1388 = vmatprep.subr.mxu0 0.0
    %1389 = vmatpush1.msra.mxu0 0.0
    %1390 = vmatprep.subr.mxu0 0.0
    %1391 = vmatpush1.msra.mxu0 0.0
    %1392 = vmatprep.subr.mxu0 0.0
    %1393 = vmatpush1.msra.mxu0 0.0
    %1394 = vmatprep.subr.mxu0 0.0
    %1395 = vmatpush1.msra.mxu0 0.0
    %1396 = vmatprep.subr.mxu0 0.0
    %1397 = vmatpush1.msra.mxu0 0.0
    %1398 = vmatprep.subr.mxu0 0.0
    %1399 = vmatpush1.msra.mxu0 0.0
    %1400 = vmatprep.subr.mxu0 0.0
    %1401 = vmatpush1.msra.mxu0 0.0
    %1402 = vmatprep.subr.mxu0 0.0
    %1403 = vmatpush1.msra.mxu0 0.0
    %1404 = vmatprep.subr.mxu0 0.0
    %1405 = vmatpush1.msra.mxu0 0.0
    %1406 = vmatprep.subr.mxu0 0.0
    %1407 = vmatpush1.msra.mxu0 0.0
    %1408 = vmatprep.subr.mxu0 0.0
    %1409 = vmatpush1.msra.mxu0 0.0
    %1410 = vmatprep.mubr.f32.mxu0 0.0
    %1411 = vmatmul.mubr.f32.gmra.mrb[0].mxu0 %v1344
    %v1412 = vpop.f32.mrb[0].mxu0
    %v1413 = vadd.f32 0.0, %v1412
    %v1414 = vpop.f32.mrb[0].mxu0
    %1415 = vdwg.mxu0
    %1417 = vset.pattern.permute.xlu0 0
    %1418 = vperm.xlu0 %1417, %v610
    %v1419 = vpop.permute.xlu0 %1418
    %v1420 = vlaneseq
    %v1421 = vshrl.u32 %v1420, 7
    %v1422 = vsub.s32 %v139, %v1421
    %v1423 = vrot.slane %v1419, %v1422
    %v1424 = vsel %vm227, %v1423, 0
    %1426 = vmatprep.subr.mxu0 0.0
    %1427 = vmatpush1.msra.mxu0 %v44
    %1428 = vmatprep.subr.mxu0 0.0
    %1429 = vmatpush1.msra.mxu0 0.0
    %1430 = vmatprep.subr.mxu0 0.0
    %1431 = vmatpush1.msra.mxu0 0.0
    %1432 = vmatprep.subr.mxu0 0.0
    %1433 = vmatpush1.msra.mxu0 0.0
    %1434 = vmatprep.subr.mxu0 0.0
    %1435 = vmatpush1.msra.mxu0 0.0
    %1436 = vmatprep.subr.mxu0 0.0
    %1437 = vmatpush1.msra.mxu0 0.0
    %1438 = vmatprep.subr.mxu0 0.0
    %1439 = vmatpush1.msra.mxu0 0.0
    %1440 = vmatprep.subr.mxu0 0.0
    %1441 = vmatpush1.msra.mxu0 0.0
    %1442 = vmatprep.subr.mxu0 0.0
    %1443 = vmatpush1.msra.mxu0 0.0
    %1444 = vmatprep.subr.mxu0 0.0
    %1445 = vmatpush1.msra.mxu0 0.0
    %1446 = vmatprep.subr.mxu0 0.0
    %1447 = vmatpush1.msra.mxu0 0.0
    %1448 = vmatprep.subr.mxu0 0.0
    %1449 = vmatpush1.msra.mxu0 0.0
    %1450 = vmatprep.subr.mxu0 0.0
    %1451 = vmatpush1.msra.mxu0 0.0
    %1452 = vmatprep.subr.mxu0 0.0
    %1453 = vmatpush1.msra.mxu0 0.0
    %1454 = vmatprep.subr.mxu0 0.0
    %1455 = vmatpush1.msra.mxu0 0.0
    %1456 = vmatprep.subr.mxu0 0.0
    %1457 = vmatpush1.msra.mxu0 0.0
    %1458 = vmatprep.subr.mxu0 0.0
    %1459 = vmatpush1.msra.mxu0 0.0
    %1460 = vmatprep.subr.mxu0 0.0
    %1461 = vmatpush1.msra.mxu0 0.0
    %1462 = vmatprep.subr.mxu0 0.0
    %1463 = vmatpush1.msra.mxu0 0.0
    %1464 = vmatprep.subr.mxu0 0.0
    %1465 = vmatpush1.msra.mxu0 0.0
    %1466 = vmatprep.subr.mxu0 0.0
    %1467 = vmatpush1.msra.mxu0 0.0
    %1468 = vmatprep.subr.mxu0 0.0
    %1469 = vmatpush1.msra.mxu0 0.0
    %1470 = vmatprep.subr.mxu0 0.0
    %1471 = vmatpush1.msra.mxu0 0.0
    %1472 = vmatprep.subr.mxu0 0.0
    %1473 = vmatpush1.msra.mxu0 0.0
    %1474 = vmatprep.subr.mxu0 0.0
    %1475 = vmatpush1.msra.mxu0 0.0
    %1476 = vmatprep.subr.mxu0 0.0
    %1477 = vmatpush1.msra.mxu0 0.0
    %1478 = vmatprep.subr.mxu0 0.0
    %1479 = vmatpush1.msra.mxu0 0.0
    %1480 = vmatprep.subr.mxu0 0.0
    %1481 = vmatpush1.msra.mxu0 0.0
    %1482 = vmatprep.subr.mxu0 0.0
    %1483 = vmatpush1.msra.mxu0 0.0
    %1484 = vmatprep.subr.mxu0 0.0
    %1485 = vmatpush1.msra.mxu0 0.0
    %1486 = vmatprep.subr.mxu0 0.0
    %1487 = vmatpush1.msra.mxu0 0.0
    %1488 = vmatprep.subr.mxu0 0.0
    %1489 = vmatpush1.msra.mxu0 0.0
    %1490 = vmatprep.mubr.f32.mxu0 0.0
    %1491 = vmatmul.mubr.f32.gmra.mrb[0].mxu0 %v1424
    %v1492 = vpop.f32.mrb[0].mxu0
    %v1493 = vadd.f32 0.0, %v1492
    %v1494 = vpop.f32.mrb[0].mxu0
    %1495 = vdwg.mxu0
    %1497 = vset.pattern.permute.xlu0 0
    %1498 = vperm.xlu0 %1497, %v611
    %v1499 = vpop.permute.xlu0 %1498
    %v1500 = vlaneseq
    %v1501 = vshrl.u32 %v1500, 7
    %v1502 = vsub.s32 %v139, %v1501
    %v1503 = vrot.slane %v1499, %v1502
    %v1504 = vsel %vm227, %v1503, 0
    %1506 = vmatprep.subr.mxu0 0.0
    %1507 = vmatpush1.msra.mxu0 %v45
    %1508 = vmatprep.subr.mxu0 0.0
    %1509 = vmatpush1.msra.mxu0 0.0
    %1510 = vmatprep.subr.mxu0 0.0
    %1511 = vmatpush1.msra.mxu0 0.0
    %1512 = vmatprep.subr.mxu0 0.0
    %1513 = vmatpush1.msra.mxu0 0.0
    %1514 = vmatprep.subr.mxu0 0.0
    %1515 = vmatpush1.msra.mxu0 0.0
    %1516 = vmatprep.subr.mxu0 0.0
    %1517 = vmatpush1.msra.mxu0 0.0
    %1518 = vmatprep.subr.mxu0 0.0
    %1519 = vmatpush1.msra.mxu0 0.0
    %1520 = vmatprep.subr.mxu0 0.0
    %1521 = vmatpush1.msra.mxu0 0.0
    %1522 = vmatprep.subr.mxu0 0.0
    %1523 = vmatpush1.msra.mxu0 0.0
    %1524 = vmatprep.subr.mxu0 0.0
    %1525 = vmatpush1.msra.mxu0 0.0
    %1526 = vmatprep.subr.mxu0 0.0
    %1527 = vmatpush1.msra.mxu0 0.0
    %1528 = vmatprep.subr.mxu0 0.0
    %1529 = vmatpush1.msra.mxu0 0.0
    %1530 = vmatprep.subr.mxu0 0.0
    %1531 = vmatpush1.msra.mxu0 0.0
    %1532 = vmatprep.subr.mxu0 0.0
    %1533 = vmatpush1.msra.mxu0 0.0
    %1534 = vmatprep.subr.mxu0 0.0
    %1535 = vmatpush1.msra.mxu0 0.0
    %1536 = vmatprep.subr.mxu0 0.0
    %1537 = vmatpush1.msra.mxu0 0.0
    %1538 = vmatprep.subr.mxu0 0.0
    %1539 = vmatpush1.msra.mxu0 0.0
    %1540 = vmatprep.subr.mxu0 0.0
    %1541 = vmatpush1.msra.mxu0 0.0
    %1542 = vmatprep.subr.mxu0 0.0
    %1543 = vmatpush1.msra.mxu0 0.0
    %1544 = vmatprep.subr.mxu0 0.0
    %1545 = vmatpush1.msra.mxu0 0.0
    %1546 = vmatprep.subr.mxu0 0.0
    %1547 = vmatpush1.msra.mxu0 0.0
    %1548 = vmatprep.subr.mxu0 0.0
    %1549 = vmatpush1.msra.mxu0 0.0
    %1550 = vmatprep.subr.mxu0 0.0
    %1551 = vmatpush1.msra.mxu0 0.0
    %1552 = vmatprep.subr.mxu0 0.0
    %1553 = vmatpush1.msra.mxu0 0.0
    %1554 = vmatprep.subr.mxu0 0.0
    %1555 = vmatpush1.msra.mxu0 0.0
    %1556 = vmatprep.subr.mxu0 0.0
    %1557 = vmatpush1.msra.mxu0 0.0
    %1558 = vmatprep.subr.mxu0 0.0
    %1559 = vmatpush1.msra.mxu0 0.0
    %1560 = vmatprep.subr.mxu0 0.0
    %1561 = vmatpush1.msra.mxu0 0.0
    %1562 = vmatprep.subr.mxu0 0.0
    %1563 = vmatpush1.msra.mxu0 0.0
    %1564 = vmatprep.subr.mxu0 0.0
    %1565 = vmatpush1.msra.mxu0 0.0
    %1566 = vmatprep.subr.mxu0 0.0
    %1567 = vmatpush1.msra.mxu0 0.0
    %1568 = vmatprep.subr.mxu0 0.0
    %1569 = vmatpush1.msra.mxu0 0.0
    %1570 = vmatprep.mubr.f32.mxu0 0.0
    %1571 = vmatmul.mubr.f32.gmra.mrb[0].mxu0 %v1504
    %v1572 = vpop.f32.mrb[0].mxu0
    %v1573 = vadd.f32 0.0, %v1572
    %v1574 = vpop.f32.mrb[0].mxu0
    %1575 = vdwg.mxu0
    %1577 = vset.pattern.permute.xlu0 0
    %1578 = vperm.xlu0 %1577, %v612
    %v1579 = vpop.permute.xlu0 %1578
    %v1580 = vlaneseq
    %v1581 = vshrl.u32 %v1580, 7
    %v1582 = vsub.s32 %v139, %v1581
    %v1583 = vrot.slane %v1579, %v1582
    %v1584 = vsel %vm227, %v1583, 0
    %1586 = vmatprep.subr.mxu0 0.0
    %1587 = vmatpush1.msra.mxu0 %v46
    %1588 = vmatprep.subr.mxu0 0.0
    %1589 = vmatpush1.msra.mxu0 0.0
    %1590 = vmatprep.subr.mxu0 0.0
    %1591 = vmatpush1.msra.mxu0 0.0
    %1592 = vmatprep.subr.mxu0 0.0
    %1593 = vmatpush1.msra.mxu0 0.0
    %1594 = vmatprep.subr.mxu0 0.0
    %1595 = vmatpush1.msra.mxu0 0.0
    %1596 = vmatprep.subr.mxu0 0.0
    %1597 = vmatpush1.msra.mxu0 0.0
    %1598 = vmatprep.subr.mxu0 0.0
    %1599 = vmatpush1.msra.mxu0 0.0
    %1600 = vmatprep.subr.mxu0 0.0
    %1601 = vmatpush1.msra.mxu0 0.0
    %1602 = vmatprep.subr.mxu0 0.0
    %1603 = vmatpush1.msra.mxu0 0.0
    %1604 = vmatprep.subr.mxu0 0.0
    %1605 = vmatpush1.msra.mxu0 0.0
    %1606 = vmatprep.subr.mxu0 0.0
    %1607 = vmatpush1.msra.mxu0 0.0
    %1608 = vmatprep.subr.mxu0 0.0
    %1609 = vmatpush1.msra.mxu0 0.0
    %1610 = vmatprep.subr.mxu0 0.0
    %1611 = vmatpush1.msra.mxu0 0.0
    %1612 = vmatprep.subr.mxu0 0.0
    %1613 = vmatpush1.msra.mxu0 0.0
    %1614 = vmatprep.subr.mxu0 0.0
    %1615 = vmatpush1.msra.mxu0 0.0
    %1616 = vmatprep.subr.mxu0 0.0
    %1617 = vmatpush1.msra.mxu0 0.0
    %1618 = vmatprep.subr.mxu0 0.0
    %1619 = vmatpush1.msra.mxu0 0.0
    %1620 = vmatprep.subr.mxu0 0.0
    %1621 = vmatpush1.msra.mxu0 0.0
    %1622 = vmatprep.subr.mxu0 0.0
    %1623 = vmatpush1.msra.mxu0 0.0
    %1624 = vmatprep.subr.mxu0 0.0
    %1625 = vmatpush1.msra.mxu0 0.0
    %1626 = vmatprep.subr.mxu0 0.0
    %1627 = vmatpush1.msra.mxu0 0.0
    %1628 = vmatprep.subr.mxu0 0.0
    %1629 = vmatpush1.msra.mxu0 0.0
    %1630 = vmatprep.subr.mxu0 0.0
    %1631 = vmatpush1.msra.mxu0 0.0
    %1632 = vmatprep.subr.mxu0 0.0
    %1633 = vmatpush1.msra.mxu0 0.0
    %1634 = vmatprep.subr.mxu0 0.0
    %1635 = vmatpush1.msra.mxu0 0.0
    %1636 = vmatprep.subr.mxu0 0.0
    %1637 = vmatpush1.msra.mxu0 0.0
    %1638 = vmatprep.subr.mxu0 0.0
    %1639 = vmatpush1.msra.mxu0 0.0
    %1640 = vmatprep.subr.mxu0 0.0
    %1641 = vmatpush1.msra.mxu0 0.0
    %1642 = vmatprep.subr.mxu0 0.0
    %1643 = vmatpush1.msra.mxu0 0.0
    %1644 = vmatprep.subr.mxu0 0.0
    %1645 = vmatpush1.msra.mxu0 0.0
    %1646 = vmatprep.subr.mxu0 0.0
    %1647 = vmatpush1.msra.mxu0 0.0
    %1648 = vmatprep.subr.mxu0 0.0
    %1649 = vmatpush1.msra.mxu0 0.0
    %1650 = vmatprep.mubr.f32.mxu0 0.0
    %1651 = vmatmul.mubr.f32.gmra.mrb[0].mxu0 %v1584
    %v1652 = vpop.f32.mrb[0].mxu0
    %v1653 = vadd.f32 0.0, %v1652
    %v1654 = vpop.f32.mrb[0].mxu0
    %1655 = vdwg.mxu0
    %1657 = vset.pattern.permute.xlu0 0
    %1658 = vperm.xlu0 %1657, %v613
    %v1659 = vpop.permute.xlu0 %1658
    %v1660 = vlaneseq
    %v1661 = vshrl.u32 %v1660, 7
    %v1662 = vsub.s32 %v139, %v1661
    %v1663 = vrot.slane %v1659, %v1662
    %v1664 = vsel %vm227, %v1663, 0
    %1666 = vmatprep.subr.mxu0 0.0
    %1667 = vmatpush1.msra.mxu0 %v47
    %1668 = vmatprep.subr.mxu0 0.0
    %1669 = vmatpush1.msra.mxu0 0.0
    %1670 = vmatprep.subr.mxu0 0.0
    %1671 = vmatpush1.msra.mxu0 0.0
    %1672 = vmatprep.subr.mxu0 0.0
    %1673 = vmatpush1.msra.mxu0 0.0
    %1674 = vmatprep.subr.mxu0 0.0
    %1675 = vmatpush1.msra.mxu0 0.0
    %1676 = vmatprep.subr.mxu0 0.0
    %1677 = vmatpush1.msra.mxu0 0.0
    %1678 = vmatprep.subr.mxu0 0.0
    %1679 = vmatpush1.msra.mxu0 0.0
    %1680 = vmatprep.subr.mxu0 0.0
    %1681 = vmatpush1.msra.mxu0 0.0
    %1682 = vmatprep.subr.mxu0 0.0
    %1683 = vmatpush1.msra.mxu0 0.0
    %1684 = vmatprep.subr.mxu0 0.0
    %1685 = vmatpush1.msra.mxu0 0.0
    %1686 = vmatprep.subr.mxu0 0.0
    %1687 = vmatpush1.msra.mxu0 0.0
    %1688 = vmatprep.subr.mxu0 0.0
    %1689 = vmatpush1.msra.mxu0 0.0
    %1690 = vmatprep.subr.mxu0 0.0
    %1691 = vmatpush1.msra.mxu0 0.0
    %1692 = vmatprep.subr.mxu0 0.0
    %1693 = vmatpush1.msra.mxu0 0.0
    %1694 = vmatprep.subr.mxu0 0.0
    %1695 = vmatpush1.msra.mxu0 0.0
    %1696 = vmatprep.subr.mxu0 0.0
    %1697 = vmatpush1.msra.mxu0 0.0
    %1698 = vmatprep.subr.mxu0 0.0
    %1699 = vmatpush1.msra.mxu0 0.0
    %1700 = vmatprep.subr.mxu0 0.0
    %1701 = vmatpush1.msra.mxu0 0.0
    %1702 = vmatprep.subr.mxu0 0.0
    %1703 = vmatpush1.msra.mxu0 0.0
    %1704 = vmatprep.subr.mxu0 0.0
    %1705 = vmatpush1.msra.mxu0 0.0
    %1706 = vmatprep.subr.mxu0 0.0
    %1707 = vmatpush1.msra.mxu0 0.0
    %1708 = vmatprep.subr.mxu0 0.0
    %1709 = vmatpush1.msra.mxu0 0.0
    %1710 = vmatprep.subr.mxu0 0.0
    %1711 = vmatpush1.msra.mxu0 0.0
    %1712 = vmatprep.subr.mxu0 0.0
    %1713 = vmatpush1.msra.mxu0 0.0
    %1714 = vmatprep.subr.mxu0 0.0
    %1715 = vmatpush1.msra.mxu0 0.0
    %1716 = vmatprep.subr.mxu0 0.0
    %1717 = vmatpush1.msra.mxu0 0.0
    %1718 = vmatprep.subr.mxu0 0.0
    %1719 = vmatpush1.msra.mxu0 0.0
    %1720 = vmatprep.subr.mxu0 0.0
    %1721 = vmatpush1.msra.mxu0 0.0
    %1722 = vmatprep.subr.mxu0 0.0
    %1723 = vmatpush1.msra.mxu0 0.0
    %1724 = vmatprep.subr.mxu0 0.0
    %1725 = vmatpush1.msra.mxu0 0.0
    %1726 = vmatprep.subr.mxu0 0.0
    %1727 = vmatpush1.msra.mxu0 0.0
    %1728 = vmatprep.subr.mxu0 0.0
    %1729 = vmatpush1.msra.mxu0 0.0
    %1730 = vmatprep.mubr.f32.mxu0 0.0
    %1731 = vmatmul.mubr.f32.gmra.mrb[0].mxu0 %v1664
    %v1732 = vpop.f32.mrb[0].mxu0
    %v1733 = vadd.f32 0.0, %v1732
    %v1734 = vpop.f32.mrb[0].mxu0
    %1735 = vdwg.mxu0
    %1737 = vset.pattern.permute.xlu0 0
    %1738 = vperm.xlu0 %1737, %v614
    %v1739 = vpop.permute.xlu0 %1738
    %v1740 = vlaneseq
    %v1741 = vshrl.u32 %v1740, 7
    %v1742 = vsub.s32 %v139, %v1741
    %v1743 = vrot.slane %v1739, %v1742
    %v1744 = vsel %vm227, %v1743, 0
    %1746 = vmatprep.subr.mxu0 0.0
    %1747 = vmatpush1.msra.mxu0 %v48
    %1748 = vmatprep.subr.mxu0 0.0
    %1749 = vmatpush1.msra.mxu0 0.0
    %1750 = vmatprep.subr.mxu0 0.0
    %1751 = vmatpush1.msra.mxu0 0.0
    %1752 = vmatprep.subr.mxu0 0.0
    %1753 = vmatpush1.msra.mxu0 0.0
    %1754 = vmatprep.subr.mxu0 0.0
    %1755 = vmatpush1.msra.mxu0 0.0
    %1756 = vmatprep.subr.mxu0 0.0
    %1757 = vmatpush1.msra.mxu0 0.0
    %1758 = vmatprep.subr.mxu0 0.0
    %1759 = vmatpush1.msra.mxu0 0.0
    %1760 = vmatprep.subr.mxu0 0.0
    %1761 = vmatpush1.msra.mxu0 0.0
    %1762 = vmatprep.subr.mxu0 0.0
    %1763 = vmatpush1.msra.mxu0 0.0
    %1764 = vmatprep.subr.mxu0 0.0
    %1765 = vmatpush1.msra.mxu0 0.0
    %1766 = vmatprep.subr.mxu0 0.0
    %1767 = vmatpush1.msra.mxu0 0.0
    %1768 = vmatprep.subr.mxu0 0.0
    %1769 = vmatpush1.msra.mxu0 0.0
    %1770 = vmatprep.subr.mxu0 0.0
    %1771 = vmatpush1.msra.mxu0 0.0
    %1772 = vmatprep.subr.mxu0 0.0
    %1773 = vmatpush1.msra.mxu0 0.0
    %1774 = vmatprep.subr.mxu0 0.0
    %1775 = vmatpush1.msra.mxu0 0.0
    %1776 = vmatprep.subr.mxu0 0.0
    %1777 = vmatpush1.msra.mxu0 0.0
    %1778 = vmatprep.subr.mxu0 0.0
    %1779 = vmatpush1.msra.mxu0 0.0
    %1780 = vmatprep.subr.mxu0 0.0
    %1781 = vmatpush1.msra.mxu0 0.0
    %1782 = vmatprep.subr.mxu0 0.0
    %1783 = vmatpush1.msra.mxu0 0.0
    %1784 = vmatprep.subr.mxu0 0.0
    %1785 = vmatpush1.msra.mxu0 0.0
    %1786 = vmatprep.subr.mxu0 0.0
    %1787 = vmatpush1.msra.mxu0 0.0
    %1788 = vmatprep.subr.mxu0 0.0
    %1789 = vmatpush1.msra.mxu0 0.0
    %1790 = vmatprep.subr.mxu0 0.0
    %1791 = vmatpush1.msra.mxu0 0.0
    %1792 = vmatprep.subr.mxu0 0.0
    %1793 = vmatpush1.msra.mxu0 0.0
    %1794 = vmatprep.subr.mxu0 0.0
    %1795 = vmatpush1.msra.mxu0 0.0
    %1796 = vmatprep.subr.mxu0 0.0
    %1797 = vmatpush1.msra.mxu0 0.0
    %1798 = vmatprep.subr.mxu0 0.0
    %1799 = vmatpush1.msra.mxu0 0.0
    %1800 = vmatprep.subr.mxu0 0.0
    %1801 = vmatpush1.msra.mxu0 0.0
    %1802 = vmatprep.subr.mxu0 0.0
    %1803 = vmatpush1.msra.mxu0 0.0
    %1804 = vmatprep.subr.mxu0 0.0
    %1805 = vmatpush1.msra.mxu0 0.0
    %1806 = vmatprep.subr.mxu0 0.0
    %1807 = vmatpush1.msra.mxu0 0.0
    %1808 = vmatprep.subr.mxu0 0.0
    %1809 = vmatpush1.msra.mxu0 0.0
    %1810 = vmatprep.mubr.f32.mxu0 0.0
    %1811 = vmatmul.mubr.f32.gmra.mrb[0].mxu0 %v1744
    %v1812 = vpop.f32.mrb[0].mxu0
    %v1813 = vadd.f32 0.0, %v1812
    %v1814 = vpop.f32.mrb[0].mxu0
    %1815 = vdwg.mxu0
    %1817 = vset.pattern.permute.xlu0 0
    %1818 = vperm.xlu0 %1817, %v615
    %v1819 = vpop.permute.xlu0 %1818
    %v1820 = vlaneseq
    %v1821 = vshrl.u32 %v1820, 7
    %v1822 = vsub.s32 %v139, %v1821
    %v1823 = vrot.slane %v1819, %v1822
    %v1824 = vsel %vm227, %v1823, 0
    %1826 = vmatprep.subr.mxu0 0.0
    %1827 = vmatpush1.msra.mxu0 %v49
    %1828 = vmatprep.subr.mxu0 0.0
    %1829 = vmatpush1.msra.mxu0 0.0
    %1830 = vmatprep.subr.mxu0 0.0
    %1831 = vmatpush1.msra.mxu0 0.0
    %1832 = vmatprep.subr.mxu0 0.0
    %1833 = vmatpush1.msra.mxu0 0.0
    %1834 = vmatprep.subr.mxu0 0.0
    %1835 = vmatpush1.msra.mxu0 0.0
    %1836 = vmatprep.subr.mxu0 0.0
    %1837 = vmatpush1.msra.mxu0 0.0
    %1838 = vmatprep.subr.mxu0 0.0
    %1839 = vmatpush1.msra.mxu0 0.0
    %1840 = vmatprep.subr.mxu0 0.0
    %1841 = vmatpush1.msra.mxu0 0.0
    %1842 = vmatprep.subr.mxu0 0.0
    %1843 = vmatpush1.msra.mxu0 0.0
    %1844 = vmatprep.subr.mxu0 0.0
    %1845 = vmatpush1.msra.mxu0 0.0
    %1846 = vmatprep.subr.mxu0 0.0
    %1847 = vmatpush1.msra.mxu0 0.0
    %1848 = vmatprep.subr.mxu0 0.0
    %1849 = vmatpush1.msra.mxu0 0.0
    %1850 = vmatprep.subr.mxu0 0.0
    %1851 = vmatpush1.msra.mxu0 0.0
    %1852 = vmatprep.subr.mxu0 0.0
    %1853 = vmatpush1.msra.mxu0 0.0
    %1854 = vmatprep.subr.mxu0 0.0
    %1855 = vmatpush1.msra.mxu0 0.0
    %1856 = vmatprep.subr.mxu0 0.0
    %1857 = vmatpush1.msra.mxu0 0.0
    %1858 = vmatprep.subr.mxu0 0.0
    %1859 = vmatpush1.msra.mxu0 0.0
    %1860 = vmatprep.subr.mxu0 0.0
    %1861 = vmatpush1.msra.mxu0 0.0
    %1862 = vmatprep.subr.mxu0 0.0
    %1863 = vmatpush1.msra.mxu0 0.0
    %1864 = vmatprep.subr.mxu0 0.0
    %1865 = vmatpush1.msra.mxu0 0.0
    %1866 = vmatprep.subr.mxu0 0.0
    %1867 = vmatpush1.msra.mxu0 0.0
    %1868 = vmatprep.subr.mxu0 0.0
    %1869 = vmatpush1.msra.mxu0 0.0
    %1870 = vmatprep.subr.mxu0 0.0
    %1871 = vmatpush1.msra.mxu0 0.0
    %1872 = vmatprep.subr.mxu0 0.0
    %1873 = vmatpush1.msra.mxu0 0.0
    %1874 = vmatprep.subr.mxu0 0.0
    %1875 = vmatpush1.msra.mxu0 0.0
    %1876 = vmatprep.subr.mxu0 0.0
    %1877 = vmatpush1.msra.mxu0 0.0
    %1878 = vmatprep.subr.mxu0 0.0
    %1879 = vmatpush1.msra.mxu0 0.0
    %1880 = vmatprep.subr.mxu0 0.0
    %1881 = vmatpush1.msra.mxu0 0.0
    %1882 = vmatprep.subr.mxu0 0.0
    %1883 = vmatpush1.msra.mxu0 0.0
    %1884 = vmatprep.subr.mxu0 0.0
    %1885 = vmatpush1.msra.mxu0 0.0
    %1886 = vmatprep.subr.mxu0 0.0
    %1887 = vmatpush1.msra.mxu0 0.0
    %1888 = vmatprep.subr.mxu0 0.0
    %1889 = vmatpush1.msra.mxu0 0.0
    %1890 = vmatprep.mubr.f32.mxu0 0.0
    %1891 = vmatmul.mubr.f32.gmra.mrb[0].mxu0 %v1824
    %v1892 = vpop.f32.mrb[0].mxu0
    %v1893 = vadd.f32 0.0, %v1892
    %v1894 = vpop.f32.mrb[0].mxu0
    %1895 = vdwg.mxu0
    %v1896 = vpack.c.bf16 %v693, %v693
    %v1897 = vpack.c.bf16 %v773, %v773
    %v1898 = vpack.c.bf16 %v853, %v853
    %v1899 = vpack.c.bf16 %v933, %v933
    %v1900 = vpack.c.bf16 %v1013, %v1013
    %v1901 = vpack.c.bf16 %v1093, %v1093
    %v1902 = vpack.c.bf16 %v1173, %v1173
    %v1903 = vpack.c.bf16 %v1253, %v1253
    %v1904 = vpack.c.bf16 %v1333, %v1333
    %v1905 = vpack.c.bf16 %v1413, %v1413
    %v1906 = vpack.c.bf16 %v1493, %v1493
    %v1907 = vpack.c.bf16 %v1573, %v1573
    %v1908 = vpack.c.bf16 %v1653, %v1653
    %v1909 = vpack.c.bf16 %v1733, %v1733
    %v1910 = vpack.c.bf16 %v1813, %v1813
    %v1911 = vpack.c.bf16 %v1893, %v1893
    %v1912 = vld [vmem:[%s2] sm:$0xf]
    %v1913 = vld [vmem:[%s2 + $0x4] sm:$0xf]
    %v1914 = vld [vmem:[%s2 + $0x8] sm:$0xf]
    %v1915 = vld [vmem:[%s2 + $0xc] sm:$0xf]
    %v1916 = vld [vmem:[%s3] sm:$0x1]
    %v1918 = vlaneseq
    %v1919 = vshrl.u32 %v1918, 7
    %v1920 = vsub.s32 0, %v1919
    %v1921 = vrot.slane %v1916, %v1920
    %v1939 = vunpack.c.l.b16 %v1896
    %v1940 = vunpack.c.l.b16 %v1897
    %v1941 = vunpack.c.l.b16 %v1898
    %v1942 = vunpack.c.l.b16 %v1899
    %v1943 = vunpack.c.l.b16 %v1900
    %v1944 = vunpack.c.l.b16 %v1901
    %v1945 = vunpack.c.l.b16 %v1902
    %v1946 = vunpack.c.l.b16 %v1903
    %v1947 = vunpack.c.l.b16 %v1904
    %v1948 = vunpack.c.l.b16 %v1905
    %v1949 = vunpack.c.l.b16 %v1906
    %v1950 = vunpack.c.l.b16 %v1907
    %v1951 = vunpack.c.l.b16 %v1908
    %v1952 = vunpack.c.l.b16 %v1909
    %v1953 = vunpack.c.l.b16 %v1910
    %v1954 = vunpack.c.l.b16 %v1911
    %v1955 = vrot.slane %v1940, 7
    %v1956 = vsel %vm204, %v1955, %v1939
    %v1957 = vrot.slane %v1941, 6
    %v1958 = vsel %vm206, %v1957, %v1956
    %v1959 = vrot.slane %v1942, 5
    %v1960 = vsel %vm208, %v1959, %v1958
    %v1961 = vrot.slane %v1943, 4
    %v1962 = vsel %vm210, %v1961, %v1960
    %v1963 = vrot.slane %v1944, 3
    %v1964 = vsel %vm212, %v1963, %v1962
    %v1965 = vrot.slane %v1945, 2
    %v1966 = vsel %vm214, %v1965, %v1964
    %v1967 = vrot.slane %v1946, 1
    %v1968 = vsel %vm216, %v1967, %v1966
    %v1969 = vrot.slane %v1948, 7
    %v1970 = vsel %vm204, %v1969, %v1947
    %v1971 = vrot.slane %v1949, 6
    %v1972 = vsel %vm206, %v1971, %v1970
    %v1973 = vrot.slane %v1950, 5
    %v1974 = vsel %vm208, %v1973, %v1972
    %v1975 = vrot.slane %v1951, 4
    %v1976 = vsel %vm210, %v1975, %v1974
    %v1977 = vrot.slane %v1952, 3
    %v1978 = vsel %vm212, %v1977, %v1976
    %v1979 = vrot.slane %v1953, 2
    %v1980 = vsel %vm214, %v1979, %v1978
    %v1981 = vrot.slane %v1954, 1
    %v1982 = vsel %vm216, %v1981, %v1980
    %v1983 = vpack.c.b16 %v1982, %v1968
    %v1988 = vunpack.c.l.b16 %v1912
    %v1989 = vunpack.c.l.b16 %v1913
    %v1990 = vunpack.c.l.b16 %v1914
    %v1991 = vunpack.c.l.b16 %v1915
    %v1992 = vpack.c.b16 %v1989, %v1988
    %v1993 = vpack.c.b16 %v1991, %v1990
    %v1997 = vsel %vm73, %v1983, 0
    %1999 = vmatprep.subr.bf16.mxu0 0
    %2000 = vmatpush1.bf16.msra.mxu0 %v1992
    %2001 = vmatprep.subr.bf16.mxu0 0
    %2002 = vmatpush1.bf16.msra.mxu0 %v1993
    %2003 = vmatprep.subr.bf16.mxu0 0
    %2004 = vmatpush1.bf16.msra.mxu0 0
    %2005 = vmatprep.subr.bf16.mxu0 0
    %2006 = vmatpush1.bf16.msra.mxu0 0
    %2007 = vmatprep.subr.bf16.mxu0 0
    %2008 = vmatpush1.bf16.msra.mxu0 0
    %2009 = vmatprep.subr.bf16.mxu0 0
    %2010 = vmatpush1.bf16.msra.mxu0 0
    %2011 = vmatprep.subr.bf16.mxu0 0
    %2012 = vmatpush1.bf16.msra.mxu0 0
    %2013 = vmatprep.subr.bf16.mxu0 0
    %2014 = vmatpush1.bf16.msra.mxu0 0
    %2015 = vmatprep.subr.bf16.mxu0 0
    %2016 = vmatpush1.bf16.msra.mxu0 0
    %2017 = vmatprep.subr.bf16.mxu0 0
    %2018 = vmatpush1.bf16.msra.mxu0 0
    %2019 = vmatprep.subr.bf16.mxu0 0
    %2020 = vmatpush1.bf16.msra.mxu0 0
    %2021 = vmatprep.subr.bf16.mxu0 0
    %2022 = vmatpush1.bf16.msra.mxu0 0
    %2023 = vmatprep.subr.bf16.mxu0 0
    %2024 = vmatpush1.bf16.msra.mxu0 0
    %2025 = vmatprep.subr.bf16.mxu0 0
    %2026 = vmatpush1.bf16.msra.mxu0 0
    %2027 = vmatprep.subr.bf16.mxu0 0
    %2028 = vmatpush1.bf16.msra.mxu0 0
    %2029 = vmatprep.subr.bf16.mxu0 0
    %2030 = vmatpush1.bf16.msra.mxu0 0
    %2031 = vmatprep.mubr.bf16.mxu0 0
    %2032 = vmatmul.mubr.bf16.gmra.mrb[0].mxu0 %v1997
    %v2033 = vpop.f32.mrb[0].mxu0
    %v2034 = vadd.f32 %v1921, %v2033
    %v2035 = vpop.f32.mrb[0].mxu0
    %v2036 = vpop.f32.mrb[0].mxu0
    %v2037 = vadd.f32 %v1921, %v2036
    %v2038 = vpop.f32.mrb[0].mxu0
    %2039 = vdwg.mxu0
    %v2040 = vmax.f32 %v2034, 0.0
    %v2041 = vmax.f32 %v2037, 0.0
    %2042 = vst [vmem:[%s4] sm:$0xff] %v2040
    %2043 = vst [vmem:[%s4 + $0x8] sm:$0xff] %v2041
    %s2044 = smul.u32 0, 16
    %v2045 = vlaneseq
    %v2046 = vshrl.u32 %v2045, 7
    %v2047 = vadd.s32 %v2046, 8
    %v2048 = vstv %s2044
    %v2049 = vadd.s32 %v2048, %v2046
    %v2050 = vadd.s32 %v2048, %v2047
    %vm2051 = vcmp.lt.s32.totalorder %v2049, 16
    %vm2052 = vcmp.lt.s32.totalorder %v2050, 16
    %v2053 = vsel %vm2051, 1, 0
    %v2054 = vsel %vm2052, 1, 0
    %vm2055 = vcmp.eq.s32.totalorder %v2053, 1
    %vm2056 = vcmp.eq.s32.totalorder %v2054, 1
    %v2057 = vsel %vm2055, %v2040, 0.0
    %v2058 = vsel %vm2056, %v2041, 0.0
    %v2059 = vadd.f32 %v2057, %v2058
    %v2060 = vrot.slane %v2059, 4
    %v2061 = vadd.f32 %v2059, %v2060
    %v2062 = vrot.slane %v2061, 2
    %v2063 = vadd.f32 %v2061, %v2062
    %v2064 = vrot.slane %v2063, 1
    %v2065 = vadd.f32 %v2063, %v2064
    %v2066 = vmul.f32 %v2057, %v2057
    %v2067 = vmul.f32 %v2058, %v2058
    %v2068 = vadd.f32 %v2066, %v2067
    %v2069 = vrot.slane %v2068, 4
    %v2070 = vadd.f32 %v2068, %v2069
    %v2071 = vrot.slane %v2070, 2
    %v2072 = vadd.f32 %v2070, %v2071
    %v2073 = vrot.slane %v2072, 1
    %v2074 = vadd.f32 %v2072, %v2073
    %vm2075 = vcmask 1040384
    %v2076 = vsel %vm2075, %v2065, %v2074
    %2077 = vst [vmem:[%s5] sm:$0x3] %v2076
    // Predicated region
    $region22: #{intent_classifier_forward.2} parent=1 // pred_check
      _
    $region23: #{intent_classifier_forward.2} parent=1 // pred_check_branch
      %2079 = sbr.rel (0) target = $region25
    $region24: #{intent_classifier_forward.2} parent=1 // pred_region
      _
    $region25: #{intent_classifier_forward.2} parent=1 // pred_fallthru
      _
    // Predicated region
    $region26: #{intent_classifier_forward.2} parent=1 // pred_check
      _
    $region27: #{intent_classifier_forward.2} parent=1 // pred_check_branch
      %2081 = sbr.rel (0) target = $region29
    $region28: #{intent_classifier_forward.2} parent=1 // pred_region
      _
    $region29: #{intent_classifier_forward.2} parent=1 // pred_fallthru
      _
    // Predicated region
    $region30: #{intent_classifier_forward.2} parent=1 // pred_check
      _
    $region31: #{intent_classifier_forward.2} parent=1 // pred_check_branch
      %2083 = sbr.rel (0) target = $region33
    $region32: #{intent_classifier_forward.2} parent=1 // pred_region
      _
    $region33: #{intent_classifier_forward.2} parent=1 // pred_fallthru
      _
    // Predicated region
    $region34: #{intent_classifier_forward.2} parent=1 // pred_check
      _
    $region35: #{intent_classifier_forward.2} parent=1 // pred_check_branch
      %2085 = sbr.rel (0) target = $region37
    $region36: #{intent_classifier_forward.2} parent=1 // pred_region
      _
    $region37: #{intent_classifier_forward.2} parent=1 // pred_fallthru
      _
    %2086 = vsyncpa [#allocation3], 1

</llo_original>
